<compile_context>
chip_gen: v7x
topology: tpu7x:2x2x1
jax: 0.10.0
libtpu: 0.0.40
codegen_flags: <defaults>
</compile_context>

<pallas_src>
import functools
import math

import jax
import jax.numpy as jnp
from jax.experimental import pallas as pl
from jax.experimental.pallas import tpu as pltpu

EPS = 1e-5         # nn.LayerNorm default eps
NEG_INF = -1e30    # Python float literal (kernels must NOT capture jax-array constants)


def _vmem_limit_bytes():
    """Generation-aware scoped-VMEM limit: ~3/4 of physical, capped at 96 MiB."""
    try:
        cap = int(pltpu.get_tpu_info().vmem_capacity_bytes)
    except Exception:
        cap = 128 * 1024 * 1024
    return min((cap * 3) // 4, 96 * 1024 * 1024)


VMEM_LIMIT = _vmem_limit_bytes()


def _round_up(x, m):
    return ((x + m - 1) // m) * m


def _divisor_tile(total, max_tile):
    """Largest divisor of `total` that is <= max_tile (gives static trip counts)."""
    t = min(total, max_tile)
    while total % t:
        t -= 1
    return t


# ----------------------------- in-kernel helpers -----------------------------

def _layer_norm(x, w, b):
    # PyTorch LayerNorm: biased variance over last dim, eps inside rsqrt. f32 math.
    mu = jnp.mean(x, axis=-1, keepdims=True)
    var = jnp.mean((x - mu) ** 2, axis=-1, keepdims=True)
    return (x - mu) * jax.lax.rsqrt(var + EPS) * w + b


def _gelu(x):
    # GPT-2 style tanh-approximate GELU (EUP tanh).
    # TODO(synk): Block definition not given; if it uses exact (erf) GELU, swap here.
    c = math.sqrt(2.0 / math.pi)
    return 0.5 * x * (1.0 + jnp.tanh(c * (x + 0.044715 * x * x * x)))


# ----------------------------- transformer block -----------------------------

def block_kernel(n_head, kv_tile, mlp_tile, x_ref,
                 ln1_w, ln1_b, w_q, b_q, w_k, b_k, w_v, b_v,
                 w_proj, b_proj, ln2_w, ln2_b, w_fc, b_fc, w_out, b_out,
                 o_ref):
    """One transformer block for one batch element: x + attn(ln1(x)); x + mlp(ln2(x))."""
    x = x_ref[0]                                   # (T, C) f32
    T, C = x.shape
    nh = n_head
    hd = C // nh
    scale = 1.0 / math.sqrt(hd)                    # Python float -> literal

    # ---- causal multi-head self-attention, flash-style over KV tiles ----
    h = _layer_norm(x, ln1_w[...], ln1_b[...])     # (T, C) f32
    hb = h.astype(jnp.bfloat16)
    q = jnp.dot(hb, w_q[...], preferred_element_type=jnp.float32) + b_q[...]
    k = jnp.dot(hb, w_k[...], preferred_element_type=jnp.float32) + b_k[...]
    v = jnp.dot(hb, w_v[...], preferred_element_type=jnp.float32) + b_v[...]

    # Cast to bf16 BEFORE the (T,C)->(nh,T,hd) split so relayout moves half the bytes.
    qh = jnp.swapaxes(q.astype(jnp.bfloat16).reshape(T, nh, hd), 0, 1)   # (nh, T, hd)
    kh = jnp.swapaxes(k.astype(jnp.bfloat16).reshape(T, nh, hd), 0, 1)
    vh = jnp.swapaxes(v.astype(jnp.bfloat16).reshape(T, nh, hd), 0, 1)

    row = jax.lax.broadcasted_iota(jnp.int32, (T, kv_tile), 0)
    col = jax.lax.broadcasted_iota(jnp.int32, (T, kv_tile), 1)

    m_i = jnp.full((nh, T, 1), NEG_INF, dtype=jnp.float32)
    l_i = jnp.zeros((nh, T, 1), dtype=jnp.float32)
    acc = jnp.zeros((nh, T, hd), dtype=jnp.float32)

    n_kv = T // kv_tile
    for kt in range(n_kv):                         # static unroll; online softmax
        k_t = kh[:, kt * kv_tile:(kt + 1) * kv_tile, :]
        v_t = vh[:, kt * kv_tile:(kt + 1) * kv_tile, :]
        s = jnp.einsum('hqd,hkd->hqk', qh, k_t,
                       preferred_element_type=jnp.float32) * scale       # (nh,T,kv)
        causal = (row >= (col + kt * kv_tile))[None, :, :]
        s = jnp.where(causal, s, NEG_INF)
        m_new = jnp.maximum(m_i, jnp.max(s, axis=-1, keepdims=True))
        alpha = jnp.exp(m_i - m_new)
        p = jnp.exp(s - m_new)
        l_i = alpha * l_i + jnp.sum(p, axis=-1, keepdims=True)
        acc = alpha * acc + jnp.einsum('hqk,hkd->hqd', p.astype(jnp.bfloat16), v_t,
                                       preferred_element_type=jnp.float32)
        m_i = m_new

    ctx = acc * pl.reciprocal(l_i, approx=True)                          # (nh, T, hd)
    ctx = jnp.swapaxes(ctx.astype(jnp.bfloat16), 0, 1).reshape(T, C)
    attn = jnp.dot(ctx, w_proj[...], preferred_element_type=jnp.float32) + b_proj[...]
    x = x + attn

    # ---- MLP (C -> 4C -> C), hidden dim processed in tiles ----
    h2 = _layer_norm(x, ln2_w[...], ln2_b[...]).astype(jnp.bfloat16)
    H4 = w_fc.shape[1]
    mlp = jnp.zeros((T, C), dtype=jnp.float32)
    for ht in range(H4 // mlp_tile):
        wf = w_fc[:, ht * mlp_tile:(ht + 1) * mlp_tile]                  # Ref slice views
        bf = b_fc[:, ht * mlp_tile:(ht + 1) * mlp_tile]
        wo = w_out[ht * mlp_tile:(ht + 1) * mlp_tile, :]
        ff = jnp.dot(h2, wf, preferred_element_type=jnp.float32) + bf
        ff = _gelu(ff)
        mlp = mlp + jnp.dot(ff.astype(jnp.bfloat16), wo,
                            preferred_element_type=jnp.float32)
    mlp = mlp + b_out[...]

    o_ref[0] = x + mlp


def run_block(x, params, n_head, *, kv_tile_max=256, mlp_tile_max=512):
    B, T, C = x.shape
    kv_tile = _divisor_tile(T, kv_tile_max)
    mlp_tile = _divisor_tile(4 * C, mlp_tile_max)

    # Weights never change across the B grid -> single-buffer them to halve their VMEM.
    weight_specs = [
        pl.BlockSpec(p.shape, lambda b: (0, 0), pipeline_mode=pl.Buffered(1))
        for p in params
    ]

    flops = int(24 * B * T * C * C + 4 * B * T * T * C)
    transcendentals = int(B * n_head * T * T + 4 * B * T * C)
    bytes_accessed = int(sum(int(p.size) * p.dtype.itemsize for p in params)
                         + 2 * B * T * C * 4)

    return pl.pallas_call(
        functools.partial(block_kernel, n_head, kv_tile, mlp_tile),
        out_shape=jax.ShapeDtypeStruct((B, T, C), x.dtype),
        grid=(B,),
        in_specs=[pl.BlockSpec((1, T, C), lambda b: (b, 0, 0))] + weight_specs,
        out_specs=pl.BlockSpec((1, T, C), lambda b: (b, 0, 0)),
        compiler_params=pltpu.CompilerParams(
            dimension_semantics=("parallel",),
            vmem_limit_bytes=VMEM_LIMIT),
        cost_estimate=pl.CostEstimate(flops=flops,
                                      transcendentals=transcendentals,
                                      bytes_accessed=bytes_accessed),
    )(x, *params)


# ------------------------------ final LN + LM head ----------------------------

def head_kernel(x_ref, lnf_w, lnf_b, w_lm, o_ref):
    xt = x_ref[...]                                # (tm, C) f32
    h = _layer_norm(xt, lnf_w[...], lnf_b[...]).astype(jnp.bfloat16)
    o_ref[...] = jnp.dot(h, w_lm[...], preferred_element_type=jnp.float32)


def run_head(x, lnf_w, lnf_b, w_lm, *, max_tile_m=512, max_tile_v=2048):
    B, T, C = x.shape
    V = w_lm.shape[1]

    # Lane-dense vocab tiles: pad V up to a multiple of the (128-aligned) tile.
    tv = min(max_tile_v, _round_up(V, 128))
    Vp = _round_up(V, tv)
    if Vp != V:
        w_lm = jnp.pad(w_lm, ((0, 0), (0, Vp - V)))

    # Flatten (B, T) into one M axis so the weight is not re-streamed per batch element.
    M = B * T
    xm = x.reshape(M, C)
    tm = min(max_tile_m, _round_up(M, 8))
    Mp = _round_up(M, tm)
    if Mp != M:
        xm = jnp.pad(xm, ((0, Mp - M), (0, 0)))

    n_v, n_m = Vp // tv, Mp // tm
    flops = int(2 * Mp * C * Vp)
    bytes_accessed = int(C * Vp * w_lm.dtype.itemsize + n_v * Mp * C * 4 + Mp * Vp * 4)

    # Vocab tile is the OUTER grid axis (M innermost), so each (C, tv) weight tile is
    # fetched from HBM exactly once.
    out = pl.pallas_call(
        head_kernel,
        out_shape=jax.ShapeDtypeStruct((Mp, Vp), jnp.float32),
        grid=(n_v, n_m),
        in_specs=[pl.BlockSpec((tm, C), lambda j, i: (i, 0)),
                  pl.BlockSpec(lnf_w.shape, lambda j, i: (0, 0)),
                  pl.BlockSpec(lnf_b.shape, lambda j, i: (0, 0)),
                  pl.BlockSpec((C, tv), lambda j, i: (0, j))],
        out_specs=pl.BlockSpec((tm, tv), lambda j, i: (i, j)),
        compiler_params=pltpu.CompilerParams(
            dimension_semantics=("parallel", "parallel"),
            vmem_limit_bytes=VMEM_LIMIT),
        cost_estimate=pl.CostEstimate(flops=flops,
                                      transcendentals=0,
                                      bytes_accessed=bytes_accessed),
    )(xm, lnf_w, lnf_b, w_lm)

    # TODO(synk): when targets are given, fuse cross-entropy into this kernel instead
    #             of writing full f32 logits to HBM.
    return out[:M, :V].reshape(B, T, V)


# ------------------------------- parameter init -------------------------------

def init_params(key, vocab_size, block_size, n_embd, n_layer):
    """Matches _init_weights: N(0, 0.02) weights, zero biases, LN weight=1 / bias=0.
    Matmul weights are stored (in, out) bf16 (MXU operands); LN params / biases /
    embeddings stay f32."""
    C = n_embd
    keys = jax.random.split(key, 3 + 6 * n_layer)
    ki = iter(keys)

    def w(shape, dtype=jnp.bfloat16):
        return (0.02 * jax.random.normal(next(ki), shape)).astype(dtype)

    def ones(shape):
        return jnp.ones(shape, jnp.float32)

    def zeros(shape):
        return jnp.zeros(shape, jnp.float32)

    params = {
        "tok_emb": w((vocab_size, C), jnp.float32),
        "pos_emb": w((block_size, C), jnp.float32),
        "blocks": [],
        "lnf_w": ones((1, C)),
        "lnf_b": zeros((1, C)),
    }
    for _ in range(n_layer):
        blk = [
            ones((1, C)), zeros((1, C)),          # ln1_w, ln1_b
            w((C, C)), zeros((1, C)),             # w_q, b_q
            w((C, C)), zeros((1, C)),             # w_k, b_k
            w((C, C)), zeros((1, C)),             # w_v, b_v
            w((C, C)), zeros((1, C)),             # w_proj, b_proj
            ones((1, C)), zeros((1, C)),          # ln2_w, ln2_b
            w((C, 4 * C)), zeros((1, 4 * C)),     # w_fc, b_fc
            w((4 * C, C)), zeros((1, C)),         # w_out, b_out
        ]
        params["blocks"].append(blk)
    params["lm_head"] = w((C, vocab_size))        # (in, out) bf16; lm_head has no bias
    return params


# --------------------------------- forward -----------------------------------

def gpt_forward(params, idx, n_head, targets=None):
    B, T = idx.shape
    # Embedding gathers (plain-JAX glue, not the hot path).
    tok = jnp.take(params["tok_emb"], idx, axis=0)            # (B, T, C)
    pos = params["pos_emb"][:T][None, :, :]                   # (1, T, C)
    x = (tok + pos).astype(jnp.float32)

    for blk in params["blocks"]:
        x = run_block(x, blk, n_head)

    logits = run_head(x, params["lnf_w"], params["lnf_b"], params["lm_head"])  # (B,T,V)

    loss = None
    if targets is not None:
        V = logits.shape[-1]
        logp = jax.nn.log_softmax(logits.reshape(-1, V), axis=-1)
        tgt = targets.reshape(-1)
        loss = -jnp.mean(logp[jnp.arange(tgt.shape[0]), tgt])
    return logits, loss


# ----------------------------------- main -------------------------------------

if __name__ == "__main__":
    # GPTConfig (small): vocab_size=64, block_size=16, n_embd=32, n_head=4, n_layer=2
    vocab_size, block_size, n_embd, n_head, n_layer = 64, 16, 32, 4, 2
    B, T = 2, 8

    key = jax.random.PRNGKey(0)
    pkey, ikey, tkey = jax.random.split(key, 3)

    params = init_params(pkey, vocab_size, block_size, n_embd, n_layer)
    idx = jax.random.randint(ikey, (B, T), 0, vocab_size, dtype=jnp.int32)
    targets = jax.random.randint(tkey, (B, T), 0, vocab_size, dtype=jnp.int32)

    logits, loss = gpt_forward(params, idx, n_head, targets=targets)
    jax.block_until_ready(logits)
    jax.block_until_ready(loss)

    assert logits.shape == (B, T, vocab_size)
    assert loss.shape == ()
    assert bool(jnp.isfinite(loss))
    print("KERNEL_OK")
</pallas_src>

<mosaic_0001>
module attributes {stable_mosaic.version = 11 : i64} {
  func.func @block_kernel(%arg0: i32, %arg1: memref<1x8x32xf32, #tpu.memory_space<vmem>>, %arg2: memref<1x32xf32, #tpu.memory_space<vmem>>, %arg3: memref<1x32xf32, #tpu.memory_space<vmem>>, %arg4: memref<32x32xbf16, #tpu.memory_space<vmem>>, %arg5: memref<1x32xf32, #tpu.memory_space<vmem>>, %arg6: memref<32x32xbf16, #tpu.memory_space<vmem>>, %arg7: memref<1x32xf32, #tpu.memory_space<vmem>>, %arg8: memref<32x32xbf16, #tpu.memory_space<vmem>>, %arg9: memref<1x32xf32, #tpu.memory_space<vmem>>, %arg10: memref<32x32xbf16, #tpu.memory_space<vmem>>, %arg11: memref<1x32xf32, #tpu.memory_space<vmem>>, %arg12: memref<1x32xf32, #tpu.memory_space<vmem>>, %arg13: memref<1x32xf32, #tpu.memory_space<vmem>>, %arg14: memref<32x128xbf16, #tpu.memory_space<vmem>>, %arg15: memref<1x128xf32, #tpu.memory_space<vmem>>, %arg16: memref<128x32xbf16, #tpu.memory_space<vmem>>, %arg17: memref<1x32xf32, #tpu.memory_space<vmem>>, %arg18: memref<1x8x32xf32, #tpu.memory_space<vmem>>) attributes {dimension_semantics = [#tpu.dimension_semantics<parallel>], iteration_bounds = array<i64: 2>, scalar_prefetch = 0 : i64, scratch_operands = 0 : i64, tpu.core_type = #tpu.core_type<tc>, window_params = [{transform_indices = @transform_0, window_bounds = array<i64: 1, 8, 32>}, {pipeline_mode = #tpu.pipeline_mode<synchronous>, transform_indices = @transform_1, window_bounds = array<i64: 1, 32>}, {pipeline_mode = #tpu.pipeline_mode<synchronous>, transform_indices = @transform_2, window_bounds = array<i64: 1, 32>}, {pipeline_mode = #tpu.pipeline_mode<synchronous>, transform_indices = @transform_3, window_bounds = array<i64: 32, 32>}, {pipeline_mode = #tpu.pipeline_mode<synchronous>, transform_indices = @transform_4, window_bounds = array<i64: 1, 32>}, {pipeline_mode = #tpu.pipeline_mode<synchronous>, transform_indices = @transform_5, window_bounds = array<i64: 32, 32>}, {pipeline_mode = #tpu.pipeline_mode<synchronous>, transform_indices = @transform_6, window_bounds = array<i64: 1, 32>}, {pipeline_mode = #tpu.pipeline_mode<synchronous>, transform_indices = @transform_7, window_bounds = array<i64: 32, 32>}, {pipeline_mode = #tpu.pipeline_mode<synchronous>, transform_indices = @transform_8, window_bounds = array<i64: 1, 32>}, {pipeline_mode = #tpu.pipeline_mode<synchronous>, transform_indices = @transform_9, window_bounds = array<i64: 32, 32>}, {pipeline_mode = #tpu.pipeline_mode<synchronous>, transform_indices = @transform_10, window_bounds = array<i64: 1, 32>}, {pipeline_mode = #tpu.pipeline_mode<synchronous>, transform_indices = @transform_11, window_bounds = array<i64: 1, 32>}, {pipeline_mode = #tpu.pipeline_mode<synchronous>, transform_indices = @transform_12, window_bounds = array<i64: 1, 32>}, {pipeline_mode = #tpu.pipeline_mode<synchronous>, transform_indices = @transform_13, window_bounds = array<i64: 32, 128>}, {pipeline_mode = #tpu.pipeline_mode<synchronous>, transform_indices = @transform_14, window_bounds = array<i64: 1, 128>}, {pipeline_mode = #tpu.pipeline_mode<synchronous>, transform_indices = @transform_15, window_bounds = array<i64: 128, 32>}, {pipeline_mode = #tpu.pipeline_mode<synchronous>, transform_indices = @transform_16, window_bounds = array<i64: 1, 32>}, {transform_indices = @transform_17, window_bounds = array<i64: 1, 8, 32>}]} {
    %c0 = arith.constant 0 : index
    %c0_0 = arith.constant 0 : index
    %c0_1 = arith.constant 0 : index
    %0 = vector.load %arg1[%c0, %c0_0, %c0_1] : memref<1x8x32xf32, #tpu.memory_space<vmem>>, vector<1x8x32xf32>
    %1 = vector.shape_cast %0 : vector<1x8x32xf32> to vector<8x32xf32>
    %c0_2 = arith.constant 0 : index
    %c0_3 = arith.constant 0 : index
    %2 = vector.load %arg2[%c0_2, %c0_3] : memref<1x32xf32, #tpu.memory_space<vmem>>, vector<1x32xf32>
    %c0_4 = arith.constant 0 : index
    %c0_5 = arith.constant 0 : index
    %3 = vector.load %arg3[%c0_4, %c0_5] : memref<1x32xf32, #tpu.memory_space<vmem>>, vector<1x32xf32>
    %cst = arith.constant dense<0.000000e+00> : vector<8xf32>
    %4 = vector.multi_reduction <add>, %1, %cst [1] : vector<8x32xf32> to vector<8xf32>
    %5 = vector.shape_cast %4 : vector<8xf32> to vector<8x1xf32>
    %cst_6 = arith.constant 3.200000e+01 : f32
    %6 = vector.broadcast %cst_6 : f32 to vector<8x1xf32>
    %7 = arith.divf %5, %6 : vector<8x1xf32>
    %8 = vector.broadcast %7 : vector<8x1xf32> to vector<8x32xf32>
    %9 = arith.subf %1, %8 : vector<8x32xf32>
    %10 = arith.mulf %9, %9 : vector<8x32xf32>
    %cst_7 = arith.constant dense<0.000000e+00> : vector<8xf32>
    %11 = vector.multi_reduction <add>, %10, %cst_7 [1] : vector<8x32xf32> to vector<8xf32>
    %12 = vector.shape_cast %11 : vector<8xf32> to vector<8x1xf32>
    %cst_8 = arith.constant 3.200000e+01 : f32
    %13 = vector.broadcast %cst_8 : f32 to vector<8x1xf32>
    %14 = arith.divf %12, %13 : vector<8x1xf32>
    %15 = vector.broadcast %7 : vector<8x1xf32> to vector<8x32xf32>
    %16 = arith.subf %1, %15 : vector<8x32xf32>
    %cst_9 = arith.constant 9.99999974E-6 : f32
    %17 = vector.broadcast %cst_9 : f32 to vector<8x1xf32>
    %18 = arith.addf %14, %17 : vector<8x1xf32>
    %19 = math.rsqrt %18 : vector<8x1xf32>
    %20 = vector.broadcast %19 : vector<8x1xf32> to vector<8x32xf32>
    %21 = arith.mulf %16, %20 : vector<8x32xf32>
    %22 = vector.broadcast %2 : vector<1x32xf32> to vector<8x32xf32>
    %23 = arith.mulf %21, %22 : vector<8x32xf32>
    %24 = vector.broadcast %3 : vector<1x32xf32> to vector<8x32xf32>
    %25 = arith.addf %23, %24 : vector<8x32xf32>
    %26 = arith.truncf %25 : vector<8x32xf32> to vector<8x32xbf16>
    %c0_10 = arith.constant 0 : index
    %c0_11 = arith.constant 0 : index
    %27 = vector.load %arg4[%c0_10, %c0_11] : memref<32x32xbf16, #tpu.memory_space<vmem>>, vector<32x32xbf16>
    %cst_12 = arith.constant dense<0.000000e+00> : vector<8x32xf32>
    %28 = tpu.matmul %26, %27, %cst_12 {dimension_numbers = #tpu.dot_dimension_numbers<[1], [0], [0], [1], [0, 0, 1, 1], [], []>} : vector<8x32xbf16>, vector<32x32xbf16>, vector<8x32xf32> -> vector<8x32xf32>
    %c0_13 = arith.constant 0 : index
    %c0_14 = arith.constant 0 : index
    %29 = vector.load %arg5[%c0_13, %c0_14] : memref<1x32xf32, #tpu.memory_space<vmem>>, vector<1x32xf32>
    %30 = vector.broadcast %29 : vector<1x32xf32> to vector<8x32xf32>
    %31 = arith.addf %28, %30 : vector<8x32xf32>
    %c0_15 = arith.constant 0 : index
    %c0_16 = arith.constant 0 : index
    %32 = vector.load %arg6[%c0_15, %c0_16] : memref<32x32xbf16, #tpu.memory_space<vmem>>, vector<32x32xbf16>
    %cst_17 = arith.constant dense<0.000000e+00> : vector<8x32xf32>
    %33 = tpu.matmul %26, %32, %cst_17 {dimension_numbers = #tpu.dot_dimension_numbers<[1], [0], [0], [1], [0, 0, 1, 1], [], []>} : vector<8x32xbf16>, vector<32x32xbf16>, vector<8x32xf32> -> vector<8x32xf32>
    %c0_18 = arith.constant 0 : index
    %c0_19 = arith.constant 0 : index
    %34 = vector.load %arg7[%c0_18, %c0_19] : memref<1x32xf32, #tpu.memory_space<vmem>>, vector<1x32xf32>
    %35 = vector.broadcast %34 : vector<1x32xf32> to vector<8x32xf32>
    %36 = arith.addf %33, %35 : vector<8x32xf32>
    %c0_20 = arith.constant 0 : index
    %c0_21 = arith.constant 0 : index
    %37 = vector.load %arg8[%c0_20, %c0_21] : memref<32x32xbf16, #tpu.memory_space<vmem>>, vector<32x32xbf16>
    %cst_22 = arith.constant dense<0.000000e+00> : vector<8x32xf32>
    %38 = tpu.matmul %26, %37, %cst_22 {dimension_numbers = #tpu.dot_dimension_numbers<[1], [0], [0], [1], [0, 0, 1, 1], [], []>} : vector<8x32xbf16>, vector<32x32xbf16>, vector<8x32xf32> -> vector<8x32xf32>
    %c0_23 = arith.constant 0 : index
    %c0_24 = arith.constant 0 : index
    %39 = vector.load %arg9[%c0_23, %c0_24] : memref<1x32xf32, #tpu.memory_space<vmem>>, vector<1x32xf32>
    %40 = vector.broadcast %39 : vector<1x32xf32> to vector<8x32xf32>
    %41 = arith.addf %38, %40 : vector<8x32xf32>
    %42 = arith.truncf %31 : vector<8x32xf32> to vector<8x32xbf16>
    %43 = vector.shape_cast %42 : vector<8x32xbf16> to vector<8x4x8xbf16>
    %44 = tpu.transpose %43, [1, 0, 2] : vector<8x4x8xbf16> -> vector<4x8x8xbf16>
    %45 = arith.truncf %36 : vector<8x32xf32> to vector<8x32xbf16>
    %46 = vector.shape_cast %45 : vector<8x32xbf16> to vector<8x4x8xbf16>
    %47 = tpu.transpose %46, [1, 0, 2] : vector<8x4x8xbf16> -> vector<4x8x8xbf16>
    %48 = arith.truncf %41 : vector<8x32xf32> to vector<8x32xbf16>
    %49 = vector.shape_cast %48 : vector<8x32xbf16> to vector<8x4x8xbf16>
    %50 = tpu.transpose %49, [1, 0, 2] : vector<8x4x8xbf16> -> vector<4x8x8xbf16>
    %51 = tpu.iota {dimensions = array<i32: 0>} : vector<8x8xi32>
    %52 = tpu.iota {dimensions = array<i32: 1>} : vector<8x8xi32>
    %cst_25 = arith.constant -1.000000e+30 : f32
    %53 = vector.broadcast %cst_25 : f32 to vector<4x8x1xf32>
    %cst_26 = arith.constant 0.000000e+00 : f32
    %54 = vector.broadcast %cst_26 : f32 to vector<4x8x1xf32>
    %cst_27 = arith.constant 0.000000e+00 : f32
    %55 = vector.broadcast %cst_27 : f32 to vector<4x8x8xf32>
    "tpu.trace_start"() <{level = 10 : i32, message = "hqd,hkd->hqk"}> : () -> ()
    %cst_28 = arith.constant dense<0.000000e+00> : vector<4x8x8xf32>
    %56 = tpu.matmul %44, %47, %cst_28 {dimension_numbers = #tpu.dot_dimension_numbers<[2], [2], [1], [1], [0, 0, 0, 1, 1, 1], [0], [0]>} : vector<4x8x8xbf16>, vector<4x8x8xbf16>, vector<4x8x8xf32> -> vector<4x8x8xf32>
    "tpu.trace_stop"() : () -> ()
    %cst_29 = arith.constant 0.353553385 : f32
    %57 = vector.broadcast %cst_29 : f32 to vector<4x8x8xf32>
    %58 = arith.mulf %56, %57 : vector<4x8x8xf32>
    %c0_i32 = arith.constant 0 : i32
    %59 = vector.broadcast %c0_i32 : i32 to vector<8x8xi32>
    %60 = arith.addi %52, %59 : vector<8x8xi32>
    %61 = arith.cmpi sge, %51, %60 : vector<8x8xi32>
    %62 = vector.shape_cast %61 : vector<8x8xi1> to vector<1x8x8xi1>
    %cst_30 = arith.constant -1.000000e+30 : f32
    %63 = vector.shape_cast %62 : vector<1x8x8xi1> to vector<1x8x8xi1>
    %64 = vector.broadcast %63 : vector<1x8x8xi1> to vector<4x8x8xi1>
    %65 = vector.broadcast %cst_30 : f32 to vector<4x8x8xf32>
    %66 = arith.select %64, %58, %65 : vector<4x8x8xi1>, vector<4x8x8xf32>
    %cst_31 = arith.constant dense<0xFF800000> : vector<4x8xf32>
    %67 = vector.multi_reduction <maximumf>, %66, %cst_31 [2] : vector<4x8x8xf32> to vector<4x8xf32>
    %68 = vector.shape_cast %67 : vector<4x8xf32> to vector<4x8x1xf32>
    %69 = arith.maximumf %53, %68 : vector<4x8x1xf32>
    %70 = arith.subf %53, %69 : vector<4x8x1xf32>
    %71 = math.exp %70 : vector<4x8x1xf32>
    %72 = vector.broadcast %69 : vector<4x8x1xf32> to vector<4x8x8xf32>
    %73 = arith.subf %66, %72 : vector<4x8x8xf32>
    %74 = math.exp %73 : vector<4x8x8xf32>
    %75 = arith.mulf %71, %54 : vector<4x8x1xf32>
    %cst_32 = arith.constant dense<0.000000e+00> : vector<4x8xf32>
    %76 = vector.multi_reduction <add>, %74, %cst_32 [2] : vector<4x8x8xf32> to vector<4x8xf32>
    %77 = vector.shape_cast %76 : vector<4x8xf32> to vector<4x8x1xf32>
    %78 = arith.addf %75, %77 : vector<4x8x1xf32>
    %79 = vector.broadcast %71 : vector<4x8x1xf32> to vector<4x8x8xf32>
    %80 = arith.mulf %79, %55 : vector<4x8x8xf32>
    %81 = arith.truncf %74 : vector<4x8x8xf32> to vector<4x8x8xbf16>
    "tpu.trace_start"() <{level = 10 : i32, message = "hqk,hkd->hqd"}> : () -> ()
    %cst_33 = arith.constant dense<0.000000e+00> : vector<4x8x8xf32>
    %82 = tpu.matmul %81, %50, %cst_33 {dimension_numbers = #tpu.dot_dimension_numbers<[2], [1], [1], [2], [0, 0, 0, 1, 1, 2], [0], [0]>} : vector<4x8x8xbf16>, vector<4x8x8xbf16>, vector<4x8x8xf32> -> vector<4x8x8xf32>
    "tpu.trace_stop"() : () -> ()
    %83 = arith.addf %80, %82 : vector<4x8x8xf32>
    %84 = tpu.reciprocal %78 {approx = true} : vector<4x8x1xf32> -> vector<4x8x1xf32>
    %85 = vector.broadcast %84 : vector<4x8x1xf32> to vector<4x8x8xf32>
    %86 = arith.mulf %83, %85 : vector<4x8x8xf32>
    %87 = arith.truncf %86 : vector<4x8x8xf32> to vector<4x8x8xbf16>
    %88 = tpu.transpose %87, [1, 0, 2] : vector<4x8x8xbf16> -> vector<8x4x8xbf16>
    %89 = vector.shape_cast %88 : vector<8x4x8xbf16> to vector<8x32xbf16>
    %c0_34 = arith.constant 0 : index
    %c0_35 = arith.constant 0 : index
    %90 = vector.load %arg10[%c0_34, %c0_35] : memref<32x32xbf16, #tpu.memory_space<vmem>>, vector<32x32xbf16>
    %cst_36 = arith.constant dense<0.000000e+00> : vector<8x32xf32>
    %91 = tpu.matmul %89, %90, %cst_36 {dimension_numbers = #tpu.dot_dimension_numbers<[1], [0], [0], [1], [0, 0, 1, 1], [], []>} : vector<8x32xbf16>, vector<32x32xbf16>, vector<8x32xf32> -> vector<8x32xf32>
    %c0_37 = arith.constant 0 : index
    %c0_38 = arith.constant 0 : index
    %92 = vector.load %arg11[%c0_37, %c0_38] : memref<1x32xf32, #tpu.memory_space<vmem>>, vector<1x32xf32>
    %93 = vector.broadcast %92 : vector<1x32xf32> to vector<8x32xf32>
    %94 = arith.addf %91, %93 : vector<8x32xf32>
    %95 = arith.addf %1, %94 : vector<8x32xf32>
    %c0_39 = arith.constant 0 : index
    %c0_40 = arith.constant 0 : index
    %96 = vector.load %arg12[%c0_39, %c0_40] : memref<1x32xf32, #tpu.memory_space<vmem>>, vector<1x32xf32>
    %c0_41 = arith.constant 0 : index
    %c0_42 = arith.constant 0 : index
    %97 = vector.load %arg13[%c0_41, %c0_42] : memref<1x32xf32, #tpu.memory_space<vmem>>, vector<1x32xf32>
    %cst_43 = arith.constant dense<0.000000e+00> : vector<8xf32>
    %98 = vector.multi_reduction <add>, %95, %cst_43 [1] : vector<8x32xf32> to vector<8xf32>
    %99 = vector.shape_cast %98 : vector<8xf32> to vector<8x1xf32>
    %cst_44 = arith.constant 3.200000e+01 : f32
    %100 = vector.broadcast %cst_44 : f32 to vector<8x1xf32>
    %101 = arith.divf %99, %100 : vector<8x1xf32>
    %102 = vector.broadcast %101 : vector<8x1xf32> to vector<8x32xf32>
    %103 = arith.subf %95, %102 : vector<8x32xf32>
    %104 = arith.mulf %103, %103 : vector<8x32xf32>
    %cst_45 = arith.constant dense<0.000000e+00> : vector<8xf32>
    %105 = vector.multi_reduction <add>, %104, %cst_45 [1] : vector<8x32xf32> to vector<8xf32>
    %106 = vector.shape_cast %105 : vector<8xf32> to vector<8x1xf32>
    %cst_46 = arith.constant 3.200000e+01 : f32
    %107 = vector.broadcast %cst_46 : f32 to vector<8x1xf32>
    %108 = arith.divf %106, %107 : vector<8x1xf32>
    %109 = vector.broadcast %101 : vector<8x1xf32> to vector<8x32xf32>
    %110 = arith.subf %95, %109 : vector<8x32xf32>
    %cst_47 = arith.constant 9.99999974E-6 : f32
    %111 = vector.broadcast %cst_47 : f32 to vector<8x1xf32>
    %112 = arith.addf %108, %111 : vector<8x1xf32>
    %113 = math.rsqrt %112 : vector<8x1xf32>
    %114 = vector.broadcast %113 : vector<8x1xf32> to vector<8x32xf32>
    %115 = arith.mulf %110, %114 : vector<8x32xf32>
    %116 = vector.broadcast %96 : vector<1x32xf32> to vector<8x32xf32>
    %117 = arith.mulf %115, %116 : vector<8x32xf32>
    %118 = vector.broadcast %97 : vector<1x32xf32> to vector<8x32xf32>
    %119 = arith.addf %117, %118 : vector<8x32xf32>
    %120 = arith.truncf %119 : vector<8x32xf32> to vector<8x32xbf16>
    %cst_48 = arith.constant 0.000000e+00 : f32
    %121 = vector.broadcast %cst_48 : f32 to vector<8x32xf32>
    %c0_49 = arith.constant 0 : index
    %c0_50 = arith.constant 0 : index
    %122 = vector.load %arg14[%c0_49, %c0_50] : memref<32x128xbf16, #tpu.memory_space<vmem>>, vector<32x128xbf16>
    %c0_51 = arith.constant 0 : index
    %c0_52 = arith.constant 0 : index
    %123 = vector.load %arg15[%c0_51, %c0_52] : memref<1x128xf32, #tpu.memory_space<vmem>>, vector<1x128xf32>
    %c0_53 = arith.constant 0 : index
    %c0_54 = arith.constant 0 : index
    %124 = vector.load %arg16[%c0_53, %c0_54] : memref<128x32xbf16, #tpu.memory_space<vmem>>, vector<128x32xbf16>
    %cst_55 = arith.constant dense<0.000000e+00> : vector<8x128xf32>
    %125 = tpu.matmul %120, %122, %cst_55 {dimension_numbers = #tpu.dot_dimension_numbers<[1], [0], [0], [1], [0, 0, 1, 1], [], []>} : vector<8x32xbf16>, vector<32x128xbf16>, vector<8x128xf32> -> vector<8x128xf32>
    %126 = vector.broadcast %123 : vector<1x128xf32> to vector<8x128xf32>
    %127 = arith.addf %125, %126 : vector<8x128xf32>
    %cst_56 = arith.constant 5.000000e-01 : f32
    %128 = vector.broadcast %cst_56 : f32 to vector<8x128xf32>
    %129 = arith.mulf %128, %127 : vector<8x128xf32>
    %cst_57 = arith.constant 4.471500e-02 : f32
    %130 = vector.broadcast %cst_57 : f32 to vector<8x128xf32>
    %131 = arith.mulf %130, %127 : vector<8x128xf32>
    %132 = arith.mulf %131, %127 : vector<8x128xf32>
    %133 = arith.mulf %132, %127 : vector<8x128xf32>
    %134 = arith.addf %127, %133 : vector<8x128xf32>
    %cst_58 = arith.constant 0.797884583 : f32
    %135 = vector.broadcast %cst_58 : f32 to vector<8x128xf32>
    %136 = arith.mulf %135, %134 : vector<8x128xf32>
    %137 = math.tanh %136 : vector<8x128xf32>
    %cst_59 = arith.constant 1.000000e+00 : f32
    %138 = vector.broadcast %cst_59 : f32 to vector<8x128xf32>
    %139 = arith.addf %138, %137 : vector<8x128xf32>
    %140 = arith.mulf %129, %139 : vector<8x128xf32>
    %141 = arith.truncf %140 : vector<8x128xf32> to vector<8x128xbf16>
    %cst_60 = arith.constant dense<0.000000e+00> : vector<8x32xf32>
    %142 = tpu.matmul %141, %124, %cst_60 {dimension_numbers = #tpu.dot_dimension_numbers<[1], [0], [0], [1], [0, 0, 1, 1], [], []>} : vector<8x128xbf16>, vector<128x32xbf16>, vector<8x32xf32> -> vector<8x32xf32>
    %143 = arith.addf %121, %142 : vector<8x32xf32>
    %c0_61 = arith.constant 0 : index
    %c0_62 = arith.constant 0 : index
    %144 = vector.load %arg17[%c0_61, %c0_62] : memref<1x32xf32, #tpu.memory_space<vmem>>, vector<1x32xf32>
    %145 = vector.broadcast %144 : vector<1x32xf32> to vector<8x32xf32>
    %146 = arith.addf %143, %145 : vector<8x32xf32>
    %147 = arith.addf %95, %146 : vector<8x32xf32>
    %c0_63 = arith.constant 0 : index
    %c0_64 = arith.constant 0 : index
    %c0_65 = arith.constant 0 : index
    %148 = vector.load %arg18[%c0_63, %c0_64, %c0_65] : memref<1x8x32xf32, #tpu.memory_space<vmem>>, vector<1x8x32xf32>
    %149 = vector.shape_cast %148 : vector<1x8x32xf32> to vector<8x32xf32>
    %150 = vector.shape_cast %147 : vector<8x32xf32> to vector<1x8x32xf32>
    tpu.vector_store %arg18[%c0_63, %c0_64, %c0_65], %150 {strides = array<i32>} : memref<1x8x32xf32, #tpu.memory_space<vmem>>, vector<1x8x32xf32>,
    return
  }
  func.func @transform_0(%arg0: i32) -> (i32, i32, i32) {
    %c0_i32 = arith.constant 0 : i32
    %c0_i32_0 = arith.constant 0 : i32
    %c0_i32_1 = arith.constant 0 : i32
    return %arg0, %c0_i32, %c0_i32_0 : i32, i32, i32
  }
  func.func @transform_1(%arg0: i32) -> (i32, i32) {
    %c0_i32 = arith.constant 0 : i32
    %c0_i32_0 = arith.constant 0 : i32
    %c0_i32_1 = arith.constant 0 : i32
    return %c0_i32, %c0_i32_0 : i32, i32
  }
  func.func @transform_2(%arg0: i32) -> (i32, i32) {
    %c0_i32 = arith.constant 0 : i32
    %c0_i32_0 = arith.constant 0 : i32
    %c0_i32_1 = arith.constant 0 : i32
    return %c0_i32, %c0_i32_0 : i32, i32
  }
  func.func @transform_3(%arg0: i32) -> (i32, i32) {
    %c0_i32 = arith.constant 0 : i32
    %c0_i32_0 = arith.constant 0 : i32
    %c0_i32_1 = arith.constant 0 : i32
    return %c0_i32, %c0_i32_0 : i32, i32
  }
  func.func @transform_4(%arg0: i32) -> (i32, i32) {
    %c0_i32 = arith.constant 0 : i32
    %c0_i32_0 = arith.constant 0 : i32
    %c0_i32_1 = arith.constant 0 : i32
    return %c0_i32, %c0_i32_0 : i32, i32
  }
  func.func @transform_5(%arg0: i32) -> (i32, i32) {
    %c0_i32 = arith.constant 0 : i32
    %c0_i32_0 = arith.constant 0 : i32
    %c0_i32_1 = arith.constant 0 : i32
    return %c0_i32, %c0_i32_0 : i32, i32
  }
  func.func @transform_6(%arg0: i32) -> (i32, i32) {
    %c0_i32 = arith.constant 0 : i32
    %c0_i32_0 = arith.constant 0 : i32
    %c0_i32_1 = arith.constant 0 : i32
    return %c0_i32, %c0_i32_0 : i32, i32
  }
  func.func @transform_7(%arg0: i32) -> (i32, i32) {
    %c0_i32 = arith.constant 0 : i32
    %c0_i32_0 = arith.constant 0 : i32
    %c0_i32_1 = arith.constant 0 : i32
    return %c0_i32, %c0_i32_0 : i32, i32
  }
  func.func @transform_8(%arg0: i32) -> (i32, i32) {
    %c0_i32 = arith.constant 0 : i32
    %c0_i32_0 = arith.constant 0 : i32
    %c0_i32_1 = arith.constant 0 : i32
    return %c0_i32, %c0_i32_0 : i32, i32
  }
  func.func @transform_9(%arg0: i32) -> (i32, i32) {
    %c0_i32 = arith.constant 0 : i32
    %c0_i32_0 = arith.constant 0 : i32
    %c0_i32_1 = arith.constant 0 : i32
    return %c0_i32, %c0_i32_0 : i32, i32
  }
  func.func @transform_10(%arg0: i32) -> (i32, i32) {
    %c0_i32 = arith.constant 0 : i32
    %c0_i32_0 = arith.constant 0 : i32
    %c0_i32_1 = arith.constant 0 : i32
    return %c0_i32, %c0_i32_0 : i32, i32
  }
  func.func @transform_11(%arg0: i32) -> (i32, i32) {
    %c0_i32 = arith.constant 0 : i32
    %c0_i32_0 = arith.constant 0 : i32
    %c0_i32_1 = arith.constant 0 : i32
    return %c0_i32, %c0_i32_0 : i32, i32
  }
  func.func @transform_12(%arg0: i32) -> (i32, i32) {
    %c0_i32 = arith.constant 0 : i32
    %c0_i32_0 = arith.constant 0 : i32
    %c0_i32_1 = arith.constant 0 : i32
    return %c0_i32, %c0_i32_0 : i32, i32
  }
  func.func @transform_13(%arg0: i32) -> (i32, i32) {
    %c0_i32 = arith.constant 0 : i32
    %c0_i32_0 = arith.constant 0 : i32
    %c0_i32_1 = arith.constant 0 : i32
    return %c0_i32, %c0_i32_0 : i32, i32
  }
  func.func @transform_14(%arg0: i32) -> (i32, i32) {
    %c0_i32 = arith.constant 0 : i32
    %c0_i32_0 = arith.constant 0 : i32
    %c0_i32_1 = arith.constant 0 : i32
    return %c0_i32, %c0_i32_0 : i32, i32
  }
  func.func @transform_15(%arg0: i32) -> (i32, i32) {
    %c0_i32 = arith.constant 0 : i32
    %c0_i32_0 = arith.constant 0 : i32
    %c0_i32_1 = arith.constant 0 : i32
    return %c0_i32, %c0_i32_0 : i32, i32
  }
  func.func @transform_16(%arg0: i32) -> (i32, i32) {
    %c0_i32 = arith.constant 0 : i32
    %c0_i32_0 = arith.constant 0 : i32
    %c0_i32_1 = arith.constant 0 : i32
    return %c0_i32, %c0_i32_0 : i32, i32
  }
  func.func @transform_17(%arg0: i32) -> (i32, i32, i32) {
    %c0_i32 = arith.constant 0 : i32
    %c0_i32_0 = arith.constant 0 : i32
    %c0_i32_1 = arith.constant 0 : i32
    return %arg0, %c0_i32, %c0_i32_0 : i32, i32, i32
  }
}

</mosaic_0001>

<llo_original>
// kernel: tpu_custom_call.1
$region0: #{tpu_custom_call.1}
  #allocation0 [shape = 'u32[]', space=smem, size = 0x4, offset = 0x4, fixed_abs, tag = 'smem constant byte address 0x4 - core index']
  #allocation1 [shape = 'u32[144,128]{1,0:T(1,128)}', space=vmem, size = 0x12000, scoped, tag = 'internal scratch']
  %s0 = inlined_call_operand.hbm [shape: f32[2,8,32], index: 0, kind: input, shape index: {}]
  %s1 = inlined_call_operand.hbm [shape: f32[1,32], index: 1, kind: input, shape index: {}]
  %s2 = inlined_call_operand.hbm [shape: f32[1,32], index: 2, kind: input, shape index: {}]
  %s3 = inlined_call_operand.hbm [shape: bf16[32,32], index: 3, kind: input, shape index: {}]
  %s4 = inlined_call_operand.hbm [shape: f32[1,32], index: 4, kind: input, shape index: {}]
  %s5 = inlined_call_operand.hbm [shape: bf16[32,32], index: 5, kind: input, shape index: {}]
  %s6 = inlined_call_operand.hbm [shape: f32[1,32], index: 6, kind: input, shape index: {}]
  %s7 = inlined_call_operand.hbm [shape: bf16[32,32], index: 7, kind: input, shape index: {}]
  %s8 = inlined_call_operand.hbm [shape: f32[1,32], index: 8, kind: input, shape index: {}]
  %s9 = inlined_call_operand.hbm [shape: bf16[32,32], index: 9, kind: input, shape index: {}]
  %s10 = inlined_call_operand.hbm [shape: f32[1,32], index: 10, kind: input, shape index: {}]
  %s11 = inlined_call_operand.hbm [shape: f32[1,32], index: 11, kind: input, shape index: {}]
  %s12 = inlined_call_operand.hbm [shape: f32[1,32], index: 12, kind: input, shape index: {}]
  %s13 = inlined_call_operand.hbm [shape: bf16[32,128], index: 13, kind: input, shape index: {}]
  %s14 = inlined_call_operand.hbm [shape: f32[1,128], index: 14, kind: input, shape index: {}]
  %s15 = inlined_call_operand.hbm [shape: bf16[128,32], index: 15, kind: input, shape index: {}]
  %s16 = inlined_call_operand.hbm [shape: f32[1,32], index: 16, kind: input, shape index: {}]
  %s17 = inlined_call_operand.hbm [shape: f32[2,8,32], index: 17, kind: output, shape index: {}]
  %s18 = sld [smem:[#allocation0]]
  $region169: #{tpu_custom_call.1} parent=0
    _
  %s20 = ssub.s32 1, %s18
  %s21 = scalar_select 0, %s20, %s18
  $region1: #{tpu_custom_call.1} parent=0
    #allocation2 [shape = 'u8[8192]{0}', space=vmem, size = 0x2000, scoped, tag = 'input window, operand 0']
    #allocation3 [shape = 's32[2]{0}', space=sflag, size = 0x8, scoped, tag = 'scoped memory for tpu_custom_call.1']
    #allocation4 [shape = 's32[2]{0}', space=sflag, size = 0x8, scoped, tag = 'scoped memory for tpu_custom_call.1']
    #allocation5 [shape = 'u8[512]{0}', space=vmem, size = 0x400, scoped, tag = 'input window, operand 1, single buffered']
    #allocation6 [shape = 's32[1]{0}', space=sflag, size = 0x4, scoped, tag = 'scoped memory for tpu_custom_call.1']
    #allocation7 [shape = 'u8[512]{0}', space=vmem, size = 0x400, scoped, tag = 'input window, operand 2, single buffered']
    #allocation8 [shape = 'u8[8192]{0}', space=vmem, size = 0x2000, scoped, tag = 'input window, operand 3, single buffered']
    #allocation9 [shape = 's32[1]{0}', space=sflag, size = 0x4, scoped, tag = 'scoped memory for tpu_custom_call.1']
    #allocation10 [shape = 'u8[512]{0}', space=vmem, size = 0x400, scoped, tag = 'input window, operand 4, single buffered']
    #allocation11 [shape = 'u8[8192]{0}', space=vmem, size = 0x2000, scoped, tag = 'input window, operand 5, single buffered']
    #allocation12 [shape = 's32[1]{0}', space=sflag, size = 0x4, scoped, tag = 'scoped memory for tpu_custom_call.1']
    #allocation13 [shape = 'u8[512]{0}', space=vmem, size = 0x400, scoped, tag = 'input window, operand 6, single buffered']
    #allocation14 [shape = 'u8[8192]{0}', space=vmem, size = 0x2000, scoped, tag = 'input window, operand 7, single buffered']
    #allocation15 [shape = 's32[1]{0}', space=sflag, size = 0x4, scoped, tag = 'scoped memory for tpu_custom_call.1']
    #allocation16 [shape = 'u8[512]{0}', space=vmem, size = 0x400, scoped, tag = 'input window, operand 8, single buffered']
    #allocation17 [shape = 'u8[8192]{0}', space=vmem, size = 0x2000, scoped, tag = 'input window, operand 9, single buffered']
    #allocation18 [shape = 's32[1]{0}', space=sflag, size = 0x4, scoped, tag = 'scoped memory for tpu_custom_call.1']
    #allocation19 [shape = 'u8[512]{0}', space=vmem, size = 0x400, scoped, tag = 'input window, operand 10, single buffered']
    #allocation20 [shape = 'u8[512]{0}', space=vmem, size = 0x400, scoped, tag = 'input window, operand 11, single buffered']
    #allocation21 [shape = 's32[1]{0}', space=sflag, size = 0x4, scoped, tag = 'scoped memory for tpu_custom_call.1']
    #allocation22 [shape = 'u8[512]{0}', space=vmem, size = 0x400, scoped, tag = 'input window, operand 12, single buffered']
    #allocation23 [shape = 'u8[8192]{0}', space=vmem, size = 0x2000, scoped, tag = 'input window, operand 13, single buffered']
    #allocation24 [shape = 's32[1]{0}', space=sflag, size = 0x4, scoped, tag = 'scoped memory for tpu_custom_call.1']
    #allocation25 [shape = 'u8[512]{0}', space=vmem, size = 0x400, scoped, tag = 'input window, operand 14, single buffered']
    #allocation26 [shape = 'u8[32768]{0}', space=vmem, size = 0x8000, scoped, tag = 'input window, operand 15, single buffered']
    #allocation27 [shape = 's32[1]{0}', space=sflag, size = 0x4, scoped, tag = 'scoped memory for tpu_custom_call.1']
    #allocation28 [shape = 'u8[512]{0}', space=vmem, size = 0x400, scoped, tag = 'input window, operand 16, single buffered']
    #allocation29 [shape = 'u8[8192]{0}', space=vmem, size = 0x2000, scoped, tag = 'output window, operand 0']
    %22 = vsyncpa [#allocation3], 0
    %s23 = scalar_lea.sflag [#allocation3], 1
    %24 = vsyncpa %s23, 0
    %25 = vsyncpa [#allocation6], 0
    %26 = vsyncpa [#allocation9], 0
    %27 = vsyncpa [#allocation12], 0
    %28 = vsyncpa [#allocation15], 0
    %29 = vsyncpa [#allocation18], 0
    %30 = vsyncpa [#allocation21], 0
    %31 = vsyncpa [#allocation24], 0
    %32 = vsyncpa [#allocation27], 0
    %33 = vsyncpa [#allocation4], 0
    %s34 = scalar_lea.sflag [#allocation4], 1
    %35 = vsyncpa %s34, 0
    loop: start=0, step=1, limit=4
    $region2: #{tpu_custom_call.1} parent=1 // loop_pre_header
      _
    $region3: #{tpu_custom_call.1} parent=1 // loop_header
      %s37 = sphi 0, %s41
      %p38 = scmp.ge.s32.totalorder %s37, 4
      %s47 = sphi 0, %s49
      %s50 = sphi 0, %s47
      %s51 = sphi 0, %s50
      %s67 = sphi 0, %s51
      %s71 = sphi 0, %s71
      %s73 = sphi 0, %s71
      %s74 = sphi 0, %s73
      %s88 = sphi 0, %s74
      %s92 = sphi 0, %s92
      %s94 = sphi 0, %s92
      %s95 = sphi 0, %s94
      %s109 = sphi 0, %s95
      %s113 = sphi 0, %s113
      %s115 = sphi 0, %s113
      %s116 = sphi 0, %s115
      %s130 = sphi 0, %s116
      %s134 = sphi 0, %s134
      %s136 = sphi 0, %s134
      %s137 = sphi 0, %s136
      %s151 = sphi 0, %s137
      %s155 = sphi 0, %s155
      %s157 = sphi 0, %s155
      %s158 = sphi 0, %s157
      %s172 = sphi 0, %s158
      %s176 = sphi 0, %s176
      %s178 = sphi 0, %s176
      %s179 = sphi 0, %s178
      %s193 = sphi 0, %s179
      %s197 = sphi 0, %s197
      %s199 = sphi 0, %s197
      %s200 = sphi 0, %s199
      %s214 = sphi 0, %s200
      %s218 = sphi 0, %s218
      %s220 = sphi 0, %s218
      %s221 = sphi 0, %s220
      %s235 = sphi 0, %s221
      %s239 = sphi 0, %s239
      %s241 = sphi 0, %s239
      %s242 = sphi 0, %s241
      %s256 = sphi 0, %s242
      %s260 = sphi 0, %s260
      %s262 = sphi 0, %s260
      %s263 = sphi 0, %s262
      %s277 = sphi 0, %s263
      %s281 = sphi 0, %s281
      %s283 = sphi 0, %s281
      %s284 = sphi 0, %s283
      %s298 = sphi 0, %s284
      %s302 = sphi 0, %s302
      %s304 = sphi 0, %s302
      %s305 = sphi 0, %s304
      %s319 = sphi 0, %s305
      %s323 = sphi 0, %s323
      %s325 = sphi 0, %s323
      %s326 = sphi 0, %s325
      %s340 = sphi 0, %s326
      %s344 = sphi 0, %s344
      %s346 = sphi 0, %s344
      %s347 = sphi 0, %s346
      %s361 = sphi 0, %s347
      %s365 = sphi 0, %s365
      %s367 = sphi 0, %s365
      %s368 = sphi 0, %s367
      %s382 = sphi 0, %s368
      %s386 = sphi 0, %s386
      %s388 = sphi 0, %s386
      %s389 = sphi 0, %s388
      %s403 = sphi 0, %s389
      %s409 = sphi 0, %s411
      %s412 = sphi 0, %s409
      %s413 = sphi 0, %s412
      %s429 = sphi 0, %s413
    $region4: #{tpu_custom_call.1} parent=1 // loop_header_branch
      %40 = sbr.rel (%p38) target = $region8
    $region5: #{tpu_custom_call.1} parent=1 // loop_body
      %s42 = ssub.s32 %s37, 1
      %s43 = ssub.s32 %s37, 2
      %s44 = sadd.s32 %s37, 1
      %s45 = ssub.s32 %s37, %s44
      %p46 = scmp.eq.s32.totalorder %s45, 0
      %s48 = sadd.s32 %s47, 1
      %s49 = scalar_select %p46, %s47, %s48
      %p52 = pneg %p46
      %p53 = scmp.eq.s32.totalorder %s37, 1
      %p54 = por %p52, %p53
      %p55 = scmp.ne.s32.totalorder %s47, %s50
      %p56 = scmp.eq.s32.totalorder %s37, 0
      %p57 = por %p55, %p56
      %p58 = scmp.ne.s32.totalorder %s47, %s50
      %p59 = scmp.eq.s32.totalorder %s42, 1
      %p60 = por %p58, %p59
      %p61 = scmp.ne.s32.totalorder %s50, %s51
      %p62 = scmp.eq.s32.totalorder %s42, 0
      %p63 = por %p61, %p62
      %p64 = scmp.ne.s32.totalorder %s50, %s51
      %p65 = scmp.eq.s32.totalorder %s43, 1
      %p66 = por %p64, %p65
      %p68 = scmp.ne.s32.totalorder %s51, %s67
      %p69 = scmp.eq.s32.totalorder %s43, 0
      %p70 = por %p68, %p69
      %s72 = sadd.s32 %s71, 1
      %p75 = scmp.eq.s32.totalorder %s37, 1
      %p76 = scmp.ne.s32.totalorder %s71, %s73
      %p77 = scmp.eq.s32.totalorder %s37, 0
      %p78 = por %p76, %p77
      %p79 = scmp.ne.s32.totalorder %s71, %s73
      %p80 = scmp.eq.s32.totalorder %s42, 1
      %p81 = por %p79, %p80
      %p82 = scmp.ne.s32.totalorder %s73, %s74
      %p83 = scmp.eq.s32.totalorder %s42, 0
      %p84 = por %p82, %p83
      %p85 = scmp.ne.s32.totalorder %s73, %s74
      %p86 = scmp.eq.s32.totalorder %s43, 1
      %p87 = por %p85, %p86
      %p89 = scmp.ne.s32.totalorder %s74, %s88
      %p90 = scmp.eq.s32.totalorder %s43, 0
      %p91 = por %p89, %p90
      %s93 = sadd.s32 %s92, 1
      %p96 = scmp.eq.s32.totalorder %s37, 1
      %p97 = scmp.ne.s32.totalorder %s92, %s94
      %p98 = scmp.eq.s32.totalorder %s37, 0
      %p99 = por %p97, %p98
      %p100 = scmp.ne.s32.totalorder %s92, %s94
      %p101 = scmp.eq.s32.totalorder %s42, 1
      %p102 = por %p100, %p101
      %p103 = scmp.ne.s32.totalorder %s94, %s95
      %p104 = scmp.eq.s32.totalorder %s42, 0
      %p105 = por %p103, %p104
      %p106 = scmp.ne.s32.totalorder %s94, %s95
      %p107 = scmp.eq.s32.totalorder %s43, 1
      %p108 = por %p106, %p107
      %p110 = scmp.ne.s32.totalorder %s95, %s109
      %p111 = scmp.eq.s32.totalorder %s43, 0
      %p112 = por %p110, %p111
      %s114 = sadd.s32 %s113, 1
      %p117 = scmp.eq.s32.totalorder %s37, 1
      %p118 = scmp.ne.s32.totalorder %s113, %s115
      %p119 = scmp.eq.s32.totalorder %s37, 0
      %p120 = por %p118, %p119
      %p121 = scmp.ne.s32.totalorder %s113, %s115
      %p122 = scmp.eq.s32.totalorder %s42, 1
      %p123 = por %p121, %p122
      %p124 = scmp.ne.s32.totalorder %s115, %s116
      %p125 = scmp.eq.s32.totalorder %s42, 0
      %p126 = por %p124, %p125
      %p127 = scmp.ne.s32.totalorder %s115, %s116
      %p128 = scmp.eq.s32.totalorder %s43, 1
      %p129 = por %p127, %p128
      %p131 = scmp.ne.s32.totalorder %s116, %s130
      %p132 = scmp.eq.s32.totalorder %s43, 0
      %p133 = por %p131, %p132
      %s135 = sadd.s32 %s134, 1
      %p138 = scmp.eq.s32.totalorder %s37, 1
      %p139 = scmp.ne.s32.totalorder %s134, %s136
      %p140 = scmp.eq.s32.totalorder %s37, 0
      %p141 = por %p139, %p140
      %p142 = scmp.ne.s32.totalorder %s134, %s136
      %p143 = scmp.eq.s32.totalorder %s42, 1
      %p144 = por %p142, %p143
      %p145 = scmp.ne.s32.totalorder %s136, %s137
      %p146 = scmp.eq.s32.totalorder %s42, 0
      %p147 = por %p145, %p146
      %p148 = scmp.ne.s32.totalorder %s136, %s137
      %p149 = scmp.eq.s32.totalorder %s43, 1
      %p150 = por %p148, %p149
      %p152 = scmp.ne.s32.totalorder %s137, %s151
      %p153 = scmp.eq.s32.totalorder %s43, 0
      %p154 = por %p152, %p153
      %s156 = sadd.s32 %s155, 1
      %p159 = scmp.eq.s32.totalorder %s37, 1
      %p160 = scmp.ne.s32.totalorder %s155, %s157
      %p161 = scmp.eq.s32.totalorder %s37, 0
      %p162 = por %p160, %p161
      %p163 = scmp.ne.s32.totalorder %s155, %s157
      %p164 = scmp.eq.s32.totalorder %s42, 1
      %p165 = por %p163, %p164
      %p166 = scmp.ne.s32.totalorder %s157, %s158
      %p167 = scmp.eq.s32.totalorder %s42, 0
      %p168 = por %p166, %p167
      %p169 = scmp.ne.s32.totalorder %s157, %s158
      %p170 = scmp.eq.s32.totalorder %s43, 1
      %p171 = por %p169, %p170
      %p173 = scmp.ne.s32.totalorder %s158, %s172
      %p174 = scmp.eq.s32.totalorder %s43, 0
      %p175 = por %p173, %p174
      %s177 = sadd.s32 %s176, 1
      %p180 = scmp.eq.s32.totalorder %s37, 1
      %p181 = scmp.ne.s32.totalorder %s176, %s178
      %p182 = scmp.eq.s32.totalorder %s37, 0
      %p183 = por %p181, %p182
      %p184 = scmp.ne.s32.totalorder %s176, %s178
      %p185 = scmp.eq.s32.totalorder %s42, 1
      %p186 = por %p184, %p185
      %p187 = scmp.ne.s32.totalorder %s178, %s179
      %p188 = scmp.eq.s32.totalorder %s42, 0
      %p189 = por %p187, %p188
      %p190 = scmp.ne.s32.totalorder %s178, %s179
      %p191 = scmp.eq.s32.totalorder %s43, 1
      %p192 = por %p190, %p191
      %p194 = scmp.ne.s32.totalorder %s179, %s193
      %p195 = scmp.eq.s32.totalorder %s43, 0
      %p196 = por %p194, %p195
      %s198 = sadd.s32 %s197, 1
      %p201 = scmp.eq.s32.totalorder %s37, 1
      %p202 = scmp.ne.s32.totalorder %s197, %s199
      %p203 = scmp.eq.s32.totalorder %s37, 0
      %p204 = por %p202, %p203
      %p205 = scmp.ne.s32.totalorder %s197, %s199
      %p206 = scmp.eq.s32.totalorder %s42, 1
      %p207 = por %p205, %p206
      %p208 = scmp.ne.s32.totalorder %s199, %s200
      %p209 = scmp.eq.s32.totalorder %s42, 0
      %p210 = por %p208, %p209
      %p211 = scmp.ne.s32.totalorder %s199, %s200
      %p212 = scmp.eq.s32.totalorder %s43, 1
      %p213 = por %p211, %p212
      %p215 = scmp.ne.s32.totalorder %s200, %s214
      %p216 = scmp.eq.s32.totalorder %s43, 0
      %p217 = por %p215, %p216
      %s219 = sadd.s32 %s218, 1
      %p222 = scmp.eq.s32.totalorder %s37, 1
      %p223 = scmp.ne.s32.totalorder %s218, %s220
      %p224 = scmp.eq.s32.totalorder %s37, 0
      %p225 = por %p223, %p224
      %p226 = scmp.ne.s32.totalorder %s218, %s220
      %p227 = scmp.eq.s32.totalorder %s42, 1
      %p228 = por %p226, %p227
      %p229 = scmp.ne.s32.totalorder %s220, %s221
      %p230 = scmp.eq.s32.totalorder %s42, 0
      %p231 = por %p229, %p230
      %p232 = scmp.ne.s32.totalorder %s220, %s221
      %p233 = scmp.eq.s32.totalorder %s43, 1
      %p234 = por %p232, %p233
      %p236 = scmp.ne.s32.totalorder %s221, %s235
      %p237 = scmp.eq.s32.totalorder %s43, 0
      %p238 = por %p236, %p237
      %s240 = sadd.s32 %s239, 1
      %p243 = scmp.eq.s32.totalorder %s37, 1
      %p244 = scmp.ne.s32.totalorder %s239, %s241
      %p245 = scmp.eq.s32.totalorder %s37, 0
      %p246 = por %p244, %p245
      %p247 = scmp.ne.s32.totalorder %s239, %s241
      %p248 = scmp.eq.s32.totalorder %s42, 1
      %p249 = por %p247, %p248
      %p250 = scmp.ne.s32.totalorder %s241, %s242
      %p251 = scmp.eq.s32.totalorder %s42, 0
      %p252 = por %p250, %p251
      %p253 = scmp.ne.s32.totalorder %s241, %s242
      %p254 = scmp.eq.s32.totalorder %s43, 1
      %p255 = por %p253, %p254
      %p257 = scmp.ne.s32.totalorder %s242, %s256
      %p258 = scmp.eq.s32.totalorder %s43, 0
      %p259 = por %p257, %p258
      %s261 = sadd.s32 %s260, 1
      %p264 = scmp.eq.s32.totalorder %s37, 1
      %p265 = scmp.ne.s32.totalorder %s260, %s262
      %p266 = scmp.eq.s32.totalorder %s37, 0
      %p267 = por %p265, %p266
      %p268 = scmp.ne.s32.totalorder %s260, %s262
      %p269 = scmp.eq.s32.totalorder %s42, 1
      %p270 = por %p268, %p269
      %p271 = scmp.ne.s32.totalorder %s262, %s263
      %p272 = scmp.eq.s32.totalorder %s42, 0
      %p273 = por %p271, %p272
      %p274 = scmp.ne.s32.totalorder %s262, %s263
      %p275 = scmp.eq.s32.totalorder %s43, 1
      %p276 = por %p274, %p275
      %p278 = scmp.ne.s32.totalorder %s263, %s277
      %p279 = scmp.eq.s32.totalorder %s43, 0
      %p280 = por %p278, %p279
      %s282 = sadd.s32 %s281, 1
      %p285 = scmp.eq.s32.totalorder %s37, 1
      %p286 = scmp.ne.s32.totalorder %s281, %s283
      %p287 = scmp.eq.s32.totalorder %s37, 0
      %p288 = por %p286, %p287
      %p289 = scmp.ne.s32.totalorder %s281, %s283
      %p290 = scmp.eq.s32.totalorder %s42, 1
      %p291 = por %p289, %p290
      %p292 = scmp.ne.s32.totalorder %s283, %s284
      %p293 = scmp.eq.s32.totalorder %s42, 0
      %p294 = por %p292, %p293
      %p295 = scmp.ne.s32.totalorder %s283, %s284
      %p296 = scmp.eq.s32.totalorder %s43, 1
      %p297 = por %p295, %p296
      %p299 = scmp.ne.s32.totalorder %s284, %s298
      %p300 = scmp.eq.s32.totalorder %s43, 0
      %p301 = por %p299, %p300
      %s303 = sadd.s32 %s302, 1
      %p306 = scmp.eq.s32.totalorder %s37, 1
      %p307 = scmp.ne.s32.totalorder %s302, %s304
      %p308 = scmp.eq.s32.totalorder %s37, 0
      %p309 = por %p307, %p308
      %p310 = scmp.ne.s32.totalorder %s302, %s304
      %p311 = scmp.eq.s32.totalorder %s42, 1
      %p312 = por %p310, %p311
      %p313 = scmp.ne.s32.totalorder %s304, %s305
      %p314 = scmp.eq.s32.totalorder %s42, 0
      %p315 = por %p313, %p314
      %p316 = scmp.ne.s32.totalorder %s304, %s305
      %p317 = scmp.eq.s32.totalorder %s43, 1
      %p318 = por %p316, %p317
      %p320 = scmp.ne.s32.totalorder %s305, %s319
      %p321 = scmp.eq.s32.totalorder %s43, 0
      %p322 = por %p320, %p321
      %s324 = sadd.s32 %s323, 1
      %p327 = scmp.eq.s32.totalorder %s37, 1
      %p328 = scmp.ne.s32.totalorder %s323, %s325
      %p329 = scmp.eq.s32.totalorder %s37, 0
      %p330 = por %p328, %p329
      %p331 = scmp.ne.s32.totalorder %s323, %s325
      %p332 = scmp.eq.s32.totalorder %s42, 1
      %p333 = por %p331, %p332
      %p334 = scmp.ne.s32.totalorder %s325, %s326
      %p335 = scmp.eq.s32.totalorder %s42, 0
      %p336 = por %p334, %p335
      %p337 = scmp.ne.s32.totalorder %s325, %s326
      %p338 = scmp.eq.s32.totalorder %s43, 1
      %p339 = por %p337, %p338
      %p341 = scmp.ne.s32.totalorder %s326, %s340
      %p342 = scmp.eq.s32.totalorder %s43, 0
      %p343 = por %p341, %p342
      %s345 = sadd.s32 %s344, 1
      %p348 = scmp.eq.s32.totalorder %s37, 1
      %p349 = scmp.ne.s32.totalorder %s344, %s346
      %p350 = scmp.eq.s32.totalorder %s37, 0
      %p351 = por %p349, %p350
      %p352 = scmp.ne.s32.totalorder %s344, %s346
      %p353 = scmp.eq.s32.totalorder %s42, 1
      %p354 = por %p352, %p353
      %p355 = scmp.ne.s32.totalorder %s346, %s347
      %p356 = scmp.eq.s32.totalorder %s42, 0
      %p357 = por %p355, %p356
      %p358 = scmp.ne.s32.totalorder %s346, %s347
      %p359 = scmp.eq.s32.totalorder %s43, 1
      %p360 = por %p358, %p359
      %p362 = scmp.ne.s32.totalorder %s347, %s361
      %p363 = scmp.eq.s32.totalorder %s43, 0
      %p364 = por %p362, %p363
      %s366 = sadd.s32 %s365, 1
      %p369 = scmp.eq.s32.totalorder %s37, 1
      %p370 = scmp.ne.s32.totalorder %s365, %s367
      %p371 = scmp.eq.s32.totalorder %s37, 0
      %p372 = por %p370, %p371
      %p373 = scmp.ne.s32.totalorder %s365, %s367
      %p374 = scmp.eq.s32.totalorder %s42, 1
      %p375 = por %p373, %p374
      %p376 = scmp.ne.s32.totalorder %s367, %s368
      %p377 = scmp.eq.s32.totalorder %s42, 0
      %p378 = por %p376, %p377
      %p379 = scmp.ne.s32.totalorder %s367, %s368
      %p380 = scmp.eq.s32.totalorder %s43, 1
      %p381 = por %p379, %p380
      %p383 = scmp.ne.s32.totalorder %s368, %s382
      %p384 = scmp.eq.s32.totalorder %s43, 0
      %p385 = por %p383, %p384
      %s387 = sadd.s32 %s386, 1
      %p390 = scmp.eq.s32.totalorder %s37, 1
      %p391 = scmp.ne.s32.totalorder %s386, %s388
      %p392 = scmp.eq.s32.totalorder %s37, 0
      %p393 = por %p391, %p392
      %p394 = scmp.ne.s32.totalorder %s386, %s388
      %p395 = scmp.eq.s32.totalorder %s42, 1
      %p396 = por %p394, %p395
      %p397 = scmp.ne.s32.totalorder %s388, %s389
      %p398 = scmp.eq.s32.totalorder %s42, 0
      %p399 = por %p397, %p398
      %p400 = scmp.ne.s32.totalorder %s388, %s389
      %p401 = scmp.eq.s32.totalorder %s43, 1
      %p402 = por %p400, %p401
      %p404 = scmp.ne.s32.totalorder %s389, %s403
      %p405 = scmp.eq.s32.totalorder %s43, 0
      %p406 = por %p404, %p405
      %s407 = ssub.s32 %s37, %s44
      %p408 = scmp.eq.s32.totalorder %s407, 0
      %s410 = sadd.s32 %s409, 1
      %s411 = scalar_select %p408, %s409, %s410
      %p414 = pneg %p408
      %p415 = scmp.eq.s32.totalorder %s37, 1
      %p416 = por %p414, %p415
      %p417 = scmp.ne.s32.totalorder %s409, %s412
      %p418 = scmp.eq.s32.totalorder %s37, 0
      %p419 = por %p417, %p418
      %p420 = scmp.ne.s32.totalorder %s409, %s412
      %p421 = scmp.eq.s32.totalorder %s42, 1
      %p422 = por %p420, %p421
      %p423 = scmp.ne.s32.totalorder %s412, %s413
      %p424 = scmp.eq.s32.totalorder %s42, 0
      %p425 = por %p423, %p424
      %p426 = scmp.ne.s32.totalorder %s412, %s413
      %p427 = scmp.eq.s32.totalorder %s43, 1
      %p428 = por %p426, %p427
      %p430 = scmp.ne.s32.totalorder %s413, %s429
      %p431 = scmp.eq.s32.totalorder %s43, 0
      %p432 = por %p430, %p431
      %p433 = scmp.le.s32.totalorder 1, %s37
      %p434 = scmp.lt.s32.totalorder %s37, 3
      %p435 = pnand %p433, %p434
      %p436 = pneg %p435
      // Predicated region
      $region9: #{tpu_custom_call.1} parent=5 // pred_check
        _
      $region10: #{tpu_custom_call.1} parent=5 // pred_check_branch
        %438 = sbr.rel (%p435) target = $region12
      $region11: #{tpu_custom_call.1} parent=5 // pred_region
        %s439 = ssub.s32 %s37, 1
        // Predicated region
        $region13: #{tpu_custom_call.1} parent=11 // pred_check
          %p440 = pneg %p84
        $region14: #{tpu_custom_call.1} parent=11 // pred_check_branch
          %442 = sbr.rel (%p440) target = $region16
        $region15: #{tpu_custom_call.1} parent=11 // pred_region
          %s444 = ssub.s32 16, 16
          %445 = vsyncadd [#allocation6], %s444
          %s447 = sshll.u32 [#allocation5], 4
          %s448 = int_to_ptr.vmem [resolvable:$true] %s447
          %450 = dma.hbm_to_vmem [thread:$0]  %s1, 16, %s448, [#allocation6]
        $region16: #{tpu_custom_call.1} parent=11 // pred_fallthru
          _
        // Predicated region
        $region17: #{tpu_custom_call.1} parent=11 // pred_check
          %p451 = pneg %p105
        $region18: #{tpu_custom_call.1} parent=11 // pred_check_branch
          %453 = sbr.rel (%p451) target = $region20
        $region19: #{tpu_custom_call.1} parent=11 // pred_region
          %s455 = ssub.s32 16, 16
          %456 = vsyncadd [#allocation6], %s455
          %s458 = sshll.u32 [#allocation7], 4
          %s459 = int_to_ptr.vmem [resolvable:$true] %s458
          %461 = dma.hbm_to_vmem [thread:$0]  %s2, 16, %s459, [#allocation6]
        $region20: #{tpu_custom_call.1} parent=11 // pred_fallthru
          _
        // Predicated region
        $region21: #{tpu_custom_call.1} parent=11 // pred_check
          %p462 = pneg %p126
        $region22: #{tpu_custom_call.1} parent=11 // pred_check_branch
          %464 = sbr.rel (%p462) target = $region24
        $region23: #{tpu_custom_call.1} parent=11 // pred_region
          %s466 = ssub.s32 256, 256
          %467 = vsyncadd [#allocation9], %s466
          %s468 = sshll.u32 [#allocation8], 4
          %s469 = int_to_ptr.vmem [resolvable:$true] %s468
          %474 = dma.hbm_to_vmem [thread:$0]  %s3, 256, %s469, [#allocation9], 64, 64, 4
        $region24: #{tpu_custom_call.1} parent=11 // pred_fallthru
          _
        // Predicated region
        $region25: #{tpu_custom_call.1} parent=11 // pred_check
          %p475 = pneg %p147
        $region26: #{tpu_custom_call.1} parent=11 // pred_check_branch
          %477 = sbr.rel (%p475) target = $region28
        $region27: #{tpu_custom_call.1} parent=11 // pred_region
          %s479 = ssub.s32 16, 16
          %480 = vsyncadd [#allocation9], %s479
          %s482 = sshll.u32 [#allocation10], 4
          %s483 = int_to_ptr.vmem [resolvable:$true] %s482
          %485 = dma.hbm_to_vmem [thread:$0]  %s4, 16, %s483, [#allocation9]
        $region28: #{tpu_custom_call.1} parent=11 // pred_fallthru
          _
        // Predicated region
        $region29: #{tpu_custom_call.1} parent=11 // pred_check
          %p486 = pneg %p168
        $region30: #{tpu_custom_call.1} parent=11 // pred_check_branch
          %488 = sbr.rel (%p486) target = $region32
        $region31: #{tpu_custom_call.1} parent=11 // pred_region
          %s490 = ssub.s32 256, 256
          %491 = vsyncadd [#allocation12], %s490
          %s492 = sshll.u32 [#allocation11], 4
          %s493 = int_to_ptr.vmem [resolvable:$true] %s492
          %498 = dma.hbm_to_vmem [thread:$0]  %s5, 256, %s493, [#allocation12], 64, 64, 4
        $region32: #{tpu_custom_call.1} parent=11 // pred_fallthru
          _
        // Predicated region
        $region33: #{tpu_custom_call.1} parent=11 // pred_check
          %p499 = pneg %p189
        $region34: #{tpu_custom_call.1} parent=11 // pred_check_branch
          %501 = sbr.rel (%p499) target = $region36
        $region35: #{tpu_custom_call.1} parent=11 // pred_region
          %s503 = ssub.s32 16, 16
          %504 = vsyncadd [#allocation12], %s503
          %s506 = sshll.u32 [#allocation13], 4
          %s507 = int_to_ptr.vmem [resolvable:$true] %s506
          %509 = dma.hbm_to_vmem [thread:$0]  %s6, 16, %s507, [#allocation12]
        $region36: #{tpu_custom_call.1} parent=11 // pred_fallthru
          _
        // Predicated region
        $region37: #{tpu_custom_call.1} parent=11 // pred_check
          %p510 = pneg %p210
        $region38: #{tpu_custom_call.1} parent=11 // pred_check_branch
          %512 = sbr.rel (%p510) target = $region40
        $region39: #{tpu_custom_call.1} parent=11 // pred_region
          %s514 = ssub.s32 256, 256
          %515 = vsyncadd [#allocation15], %s514
          %s516 = sshll.u32 [#allocation14], 4
          %s517 = int_to_ptr.vmem [resolvable:$true] %s516
          %522 = dma.hbm_to_vmem [thread:$0]  %s7, 256, %s517, [#allocation15], 64, 64, 4
        $region40: #{tpu_custom_call.1} parent=11 // pred_fallthru
          _
        // Predicated region
        $region41: #{tpu_custom_call.1} parent=11 // pred_check
          %p523 = pneg %p231
        $region42: #{tpu_custom_call.1} parent=11 // pred_check_branch
          %525 = sbr.rel (%p523) target = $region44
        $region43: #{tpu_custom_call.1} parent=11 // pred_region
          %s527 = ssub.s32 16, 16
          %528 = vsyncadd [#allocation15], %s527
          %s530 = sshll.u32 [#allocation16], 4
          %s531 = int_to_ptr.vmem [resolvable:$true] %s530
          %533 = dma.hbm_to_vmem [thread:$0]  %s8, 16, %s531, [#allocation15]
        $region44: #{tpu_custom_call.1} parent=11 // pred_fallthru
          _
        // Predicated region
        $region45: #{tpu_custom_call.1} parent=11 // pred_check
          %p534 = pneg %p252
        $region46: #{tpu_custom_call.1} parent=11 // pred_check_branch
          %536 = sbr.rel (%p534) target = $region48
        $region47: #{tpu_custom_call.1} parent=11 // pred_region
          %s538 = ssub.s32 256, 256
          %539 = vsyncadd [#allocation18], %s538
          %s540 = sshll.u32 [#allocation17], 4
          %s541 = int_to_ptr.vmem [resolvable:$true] %s540
          %546 = dma.hbm_to_vmem [thread:$0]  %s9, 256, %s541, [#allocation18], 64, 64, 4
        $region48: #{tpu_custom_call.1} parent=11 // pred_fallthru
          _
        // Predicated region
        $region49: #{tpu_custom_call.1} parent=11 // pred_check
          %p547 = pneg %p273
        $region50: #{tpu_custom_call.1} parent=11 // pred_check_branch
          %549 = sbr.rel (%p547) target = $region52
        $region51: #{tpu_custom_call.1} parent=11 // pred_region
          %s551 = ssub.s32 16, 16
          %552 = vsyncadd [#allocation18], %s551
          %s554 = sshll.u32 [#allocation19], 4
          %s555 = int_to_ptr.vmem [resolvable:$true] %s554
          %557 = dma.hbm_to_vmem [thread:$0]  %s10, 16, %s555, [#allocation18]
        $region52: #{tpu_custom_call.1} parent=11 // pred_fallthru
          _
        // Predicated region
        $region53: #{tpu_custom_call.1} parent=11 // pred_check
          %p558 = pneg %p294
        $region54: #{tpu_custom_call.1} parent=11 // pred_check_branch
          %560 = sbr.rel (%p558) target = $region56
        $region55: #{tpu_custom_call.1} parent=11 // pred_region
          %s562 = ssub.s32 16, 16
          %563 = vsyncadd [#allocation21], %s562
          %s565 = sshll.u32 [#allocation20], 4
          %s566 = int_to_ptr.vmem [resolvable:$true] %s565
          %568 = dma.hbm_to_vmem [thread:$0]  %s11, 16, %s566, [#allocation21]
        $region56: #{tpu_custom_call.1} parent=11 // pred_fallthru
          _
        // Predicated region
        $region57: #{tpu_custom_call.1} parent=11 // pred_check
          %p569 = pneg %p315
        $region58: #{tpu_custom_call.1} parent=11 // pred_check_branch
          %571 = sbr.rel (%p569) target = $region60
        $region59: #{tpu_custom_call.1} parent=11 // pred_region
          %s573 = ssub.s32 16, 16
          %574 = vsyncadd [#allocation21], %s573
          %s576 = sshll.u32 [#allocation22], 4
          %s577 = int_to_ptr.vmem [resolvable:$true] %s576
          %579 = dma.hbm_to_vmem [thread:$0]  %s12, 16, %s577, [#allocation21]
        $region60: #{tpu_custom_call.1} parent=11 // pred_fallthru
          _
        // Predicated region
        $region61: #{tpu_custom_call.1} parent=11 // pred_check
          %p580 = pneg %p336
        $region62: #{tpu_custom_call.1} parent=11 // pred_check_branch
          %582 = sbr.rel (%p580) target = $region64
        $region63: #{tpu_custom_call.1} parent=11 // pred_region
          %s584 = ssub.s32 256, 256
          %585 = vsyncadd [#allocation24], %s584
          %s586 = sshll.u32 [#allocation23], 4
          %s587 = int_to_ptr.vmem [resolvable:$true] %s586
          %592 = dma.hbm_to_vmem [thread:$0]  %s13, 256, %s587, [#allocation24], 64, 64, 4
        $region64: #{tpu_custom_call.1} parent=11 // pred_fallthru
          _
        // Predicated region
        $region65: #{tpu_custom_call.1} parent=11 // pred_check
          %p593 = pneg %p357
        $region66: #{tpu_custom_call.1} parent=11 // pred_check_branch
          %595 = sbr.rel (%p593) target = $region68
        $region67: #{tpu_custom_call.1} parent=11 // pred_region
          %s597 = ssub.s32 16, 16
          %598 = vsyncadd [#allocation24], %s597
          %s600 = sshll.u32 [#allocation25], 4
          %s601 = int_to_ptr.vmem [resolvable:$true] %s600
          %603 = dma.hbm_to_vmem [thread:$0]  %s14, 16, %s601, [#allocation24]
        $region68: #{tpu_custom_call.1} parent=11 // pred_fallthru
          _
        // Predicated region
        $region69: #{tpu_custom_call.1} parent=11 // pred_check
          %p604 = pneg %p378
        $region70: #{tpu_custom_call.1} parent=11 // pred_check_branch
          %606 = sbr.rel (%p604) target = $region72
        $region71: #{tpu_custom_call.1} parent=11 // pred_region
          %s608 = ssub.s32 1024, 1024
          %609 = vsyncadd [#allocation27], %s608
          %s610 = sshll.u32 [#allocation26], 4
          %s611 = int_to_ptr.vmem [resolvable:$true] %s610
          %616 = dma.hbm_to_vmem [thread:$0]  %s15, 1024, %s611, [#allocation27], 64, 64, 4
        $region72: #{tpu_custom_call.1} parent=11 // pred_fallthru
          _
        // Predicated region
        $region73: #{tpu_custom_call.1} parent=11 // pred_check
          %p617 = pneg %p399
        $region74: #{tpu_custom_call.1} parent=11 // pred_check_branch
          %619 = sbr.rel (%p617) target = $region76
        $region75: #{tpu_custom_call.1} parent=11 // pred_region
          %s621 = ssub.s32 16, 16
          %622 = vsyncadd [#allocation27], %s621
          %s624 = sshll.u32 [#allocation28], 4
          %s625 = int_to_ptr.vmem [resolvable:$true] %s624
          %627 = dma.hbm_to_vmem [thread:$0]  %s16, 16, %s625, [#allocation27]
        $region76: #{tpu_custom_call.1} parent=11 // pred_fallthru
          _
      $region12: #{tpu_custom_call.1} parent=5 // pred_fallthru
        _
      %p628 = scmp.lt.s32.totalorder %s37, 2
      // Predicated region
      $region77: #{tpu_custom_call.1} parent=5 // pred_check
        %p629 = pneg %p628
      $region78: #{tpu_custom_call.1} parent=5 // pred_check_branch
        %631 = sbr.rel (%p629) target = $region80
      $region79: #{tpu_custom_call.1} parent=5 // pred_region
        // Predicated region
        $region81: #{tpu_custom_call.1} parent=79 // pred_check
          %p632 = pneg %p57
        $region82: #{tpu_custom_call.1} parent=79 // pred_check_branch
          %634 = sbr.rel (%p632) target = $region84
        $region83: #{tpu_custom_call.1} parent=79 // pred_region
          %s635 = sand.u32 %s47, 1
          %s636 = scalar_lea.sflag [#allocation3], %s635
          %s637 = sand.u32 %s47, 1
          %s638 = smul.addr %s637, 8
          %s639 = scalar_lea.vmem [#allocation2], %s638
          %s641 = ssub.s32 128, 128
          %642 = vsyncadd %s636, %s641
          %s643 = smul.addr %s37, 128
          %s644 = scalar_lea.hbm %s0, %s643
          %s646 = sshll.u32 %s639, 4
          %s647 = int_to_ptr.vmem [resolvable:$true] %s646
          %649 = dma.hbm_to_vmem [thread:$0]  %s644, 128, %s647, %s636
        $region84: #{tpu_custom_call.1} parent=79 // pred_fallthru
          _
      $region80: #{tpu_custom_call.1} parent=5 // pred_fallthru
        _
      %p650 = scmp.le.s32.totalorder 1, %s37
      %p651 = scmp.lt.s32.totalorder %s37, 3
      %p652 = pnand %p650, %p651
      %p653 = pneg %p652
      // Predicated region
      $region85: #{tpu_custom_call.1} parent=5 // pred_check
        _
      $region86: #{tpu_custom_call.1} parent=5 // pred_check_branch
        %655 = sbr.rel (%p652) target = $region88
      $region87: #{tpu_custom_call.1} parent=5 // pred_region
        %s656 = ssub.s32 %s37, 1
        %s657 = sand.u32 %s50, 1
        %s658 = scalar_lea.sflag [#allocation3], %s657
        %s659 = sand.u32 %s50, 1
        %s660 = smul.addr %s659, 8
        %s661 = scalar_lea.vmem [#allocation2], %s660
        // Predicated region
        $region89: #{tpu_custom_call.1} parent=87 // pred_check
          %p662 = pneg %p63
        $region90: #{tpu_custom_call.1} parent=87 // pred_check_branch
          %664 = sbr.rel (%p662) target = $region92
        $region91: #{tpu_custom_call.1} parent=87 // pred_region
          %665 = dma.done %s658, 128
        $region92: #{tpu_custom_call.1} parent=87 // pred_fallthru
          _
        // Predicated region
        $region93: #{tpu_custom_call.1} parent=87 // pred_check
          %p666 = pneg %p84
        $region94: #{tpu_custom_call.1} parent=87 // pred_check_branch
          %668 = sbr.rel (%p666) target = $region96
        $region95: #{tpu_custom_call.1} parent=87 // pred_region
          %669 = dma.done [#allocation6], 16
        $region96: #{tpu_custom_call.1} parent=87 // pred_fallthru
          _
        // Predicated region
        $region97: #{tpu_custom_call.1} parent=87 // pred_check
          %p670 = pneg %p105
        $region98: #{tpu_custom_call.1} parent=87 // pred_check_branch
          %672 = sbr.rel (%p670) target = $region100
        $region99: #{tpu_custom_call.1} parent=87 // pred_region
          %673 = dma.done [#allocation6], 16
        $region100: #{tpu_custom_call.1} parent=87 // pred_fallthru
          _
        // Predicated region
        $region101: #{tpu_custom_call.1} parent=87 // pred_check
          %p674 = pneg %p126
        $region102: #{tpu_custom_call.1} parent=87 // pred_check_branch
          %676 = sbr.rel (%p674) target = $region104
        $region103: #{tpu_custom_call.1} parent=87 // pred_region
          %677 = dma.done [#allocation9], 256
        $region104: #{tpu_custom_call.1} parent=87 // pred_fallthru
          _
        // Predicated region
        $region105: #{tpu_custom_call.1} parent=87 // pred_check
          %p678 = pneg %p147
        $region106: #{tpu_custom_call.1} parent=87 // pred_check_branch
          %680 = sbr.rel (%p678) target = $region108
        $region107: #{tpu_custom_call.1} parent=87 // pred_region
          %681 = dma.done [#allocation9], 16
        $region108: #{tpu_custom_call.1} parent=87 // pred_fallthru
          _
        // Predicated region
        $region109: #{tpu_custom_call.1} parent=87 // pred_check
          %p682 = pneg %p168
        $region110: #{tpu_custom_call.1} parent=87 // pred_check_branch
          %684 = sbr.rel (%p682) target = $region112
        $region111: #{tpu_custom_call.1} parent=87 // pred_region
          %685 = dma.done [#allocation12], 256
        $region112: #{tpu_custom_call.1} parent=87 // pred_fallthru
          _
        // Predicated region
        $region113: #{tpu_custom_call.1} parent=87 // pred_check
          %p686 = pneg %p189
        $region114: #{tpu_custom_call.1} parent=87 // pred_check_branch
          %688 = sbr.rel (%p686) target = $region116
        $region115: #{tpu_custom_call.1} parent=87 // pred_region
          %689 = dma.done [#allocation12], 16
        $region116: #{tpu_custom_call.1} parent=87 // pred_fallthru
          _
        // Predicated region
        $region117: #{tpu_custom_call.1} parent=87 // pred_check
          %p690 = pneg %p210
        $region118: #{tpu_custom_call.1} parent=87 // pred_check_branch
          %692 = sbr.rel (%p690) target = $region120
        $region119: #{tpu_custom_call.1} parent=87 // pred_region
          %693 = dma.done [#allocation15], 256
        $region120: #{tpu_custom_call.1} parent=87 // pred_fallthru
          _
        // Predicated region
        $region121: #{tpu_custom_call.1} parent=87 // pred_check
          %p694 = pneg %p231
        $region122: #{tpu_custom_call.1} parent=87 // pred_check_branch
          %696 = sbr.rel (%p694) target = $region124
        $region123: #{tpu_custom_call.1} parent=87 // pred_region
          %697 = dma.done [#allocation15], 16
        $region124: #{tpu_custom_call.1} parent=87 // pred_fallthru
          _
        // Predicated region
        $region125: #{tpu_custom_call.1} parent=87 // pred_check
          %p698 = pneg %p252
        $region126: #{tpu_custom_call.1} parent=87 // pred_check_branch
          %700 = sbr.rel (%p698) target = $region128
        $region127: #{tpu_custom_call.1} parent=87 // pred_region
          %701 = dma.done [#allocation18], 256
        $region128: #{tpu_custom_call.1} parent=87 // pred_fallthru
          _
        // Predicated region
        $region129: #{tpu_custom_call.1} parent=87 // pred_check
          %p702 = pneg %p273
        $region130: #{tpu_custom_call.1} parent=87 // pred_check_branch
          %704 = sbr.rel (%p702) target = $region132
        $region131: #{tpu_custom_call.1} parent=87 // pred_region
          %705 = dma.done [#allocation18], 16
        $region132: #{tpu_custom_call.1} parent=87 // pred_fallthru
          _
        // Predicated region
        $region133: #{tpu_custom_call.1} parent=87 // pred_check
          %p706 = pneg %p294
        $region134: #{tpu_custom_call.1} parent=87 // pred_check_branch
          %708 = sbr.rel (%p706) target = $region136
        $region135: #{tpu_custom_call.1} parent=87 // pred_region
          %709 = dma.done [#allocation21], 16
        $region136: #{tpu_custom_call.1} parent=87 // pred_fallthru
          _
        // Predicated region
        $region137: #{tpu_custom_call.1} parent=87 // pred_check
          %p710 = pneg %p315
        $region138: #{tpu_custom_call.1} parent=87 // pred_check_branch
          %712 = sbr.rel (%p710) target = $region140
        $region139: #{tpu_custom_call.1} parent=87 // pred_region
          %713 = dma.done [#allocation21], 16
        $region140: #{tpu_custom_call.1} parent=87 // pred_fallthru
          _
        // Predicated region
        $region141: #{tpu_custom_call.1} parent=87 // pred_check
          %p714 = pneg %p336
        $region142: #{tpu_custom_call.1} parent=87 // pred_check_branch
          %716 = sbr.rel (%p714) target = $region144
        $region143: #{tpu_custom_call.1} parent=87 // pred_region
          %717 = dma.done [#allocation24], 256
        $region144: #{tpu_custom_call.1} parent=87 // pred_fallthru
          _
        // Predicated region
        $region145: #{tpu_custom_call.1} parent=87 // pred_check
          %p718 = pneg %p357
        $region146: #{tpu_custom_call.1} parent=87 // pred_check_branch
          %720 = sbr.rel (%p718) target = $region148
        $region147: #{tpu_custom_call.1} parent=87 // pred_region
          %721 = dma.done [#allocation24], 16
        $region148: #{tpu_custom_call.1} parent=87 // pred_fallthru
          _
        // Predicated region
        $region149: #{tpu_custom_call.1} parent=87 // pred_check
          %p722 = pneg %p378
        $region150: #{tpu_custom_call.1} parent=87 // pred_check_branch
          %724 = sbr.rel (%p722) target = $region152
        $region151: #{tpu_custom_call.1} parent=87 // pred_region
          %725 = dma.done [#allocation27], 1024
        $region152: #{tpu_custom_call.1} parent=87 // pred_fallthru
          _
        // Predicated region
        $region153: #{tpu_custom_call.1} parent=87 // pred_check
          %p726 = pneg %p399
        $region154: #{tpu_custom_call.1} parent=87 // pred_check_branch
          %728 = sbr.rel (%p726) target = $region156
        $region155: #{tpu_custom_call.1} parent=87 // pred_region
          %729 = dma.done [#allocation27], 16
        $region156: #{tpu_custom_call.1} parent=87 // pred_fallthru
          _
        %s730 = sand.u32 %s50, 1
        %s731 = scalar_lea.sflag [#allocation3], %s730
        %s732 = sand.u32 %s50, 1
        %s733 = smul.addr %s732, 8
        %s734 = scalar_lea.vmem [#allocation2], %s733
        %p735 = pneg %p63
        %p736 = pneg %p60
        %p737 = pneg %p84
        %p738 = pneg %p81
        %p739 = pneg %p105
        %p740 = pneg %p102
        %p741 = pneg %p126
        %p742 = pneg %p123
        %p743 = pneg %p147
        %p744 = pneg %p144
        %p745 = pneg %p168
        %p746 = pneg %p165
        %p747 = pneg %p189
        %p748 = pneg %p186
        %p749 = pneg %p210
        %p750 = pneg %p207
        %p751 = pneg %p231
        %p752 = pneg %p228
        %p753 = pneg %p252
        %p754 = pneg %p249
        %p755 = pneg %p273
        %p756 = pneg %p270
        %p757 = pneg %p294
        %p758 = pneg %p291
        %p759 = pneg %p315
        %p760 = pneg %p312
        %p761 = pneg %p336
        %p762 = pneg %p333
        %p763 = pneg %p357
        %p764 = pneg %p354
        %p765 = pneg %p378
        %p766 = pneg %p375
        %p767 = pneg %p399
        %p768 = pneg %p396
        %p769 = pneg %p425
        %p770 = pneg %p422
        %s771 = sand.u32 %s412, 1
        %s772 = scalar_lea.sflag [#allocation4], %s771
        %s773 = sand.u32 %s412, 1
        %s774 = smul.addr %s773, 8
        %s775 = scalar_lea.vmem [#allocation29], %s774
        %v777 = vld [vmem:[%s661] sm:$0xff]
        %v778 = vld [vmem:[#allocation5] sm:$0x1]
        %v779 = vld [vmem:[#allocation7] sm:$0x1]
        %vm780 = vcmask 261120
        %v781 = vsel %vm780, %v777, 0.0
        %782 = vadd.xlane.f32.xlu0 %v781
        %v783 = vpop.xlane.xlu0 %782
        %v784 = vrcp.pop 32.0
        %v785 = vmul.f32 %v783, %v784
        %v786 = vsub.f32 %v777, %v785
        %v787 = vmul.f32 %v786, %v786
        %v788 = vsel %vm780, %v787, 0.0
        %789 = vadd.xlane.f32.xlu0 %v788
        %v790 = vpop.xlane.xlu0 %789
        %v791 = vmul.f32 %v790, %v784
        %v792 = vadd.f32 %v791, 1e-05
        %v793 = vrsqrt.pop %v792
        %v794 = vmul.f32 %v786, %v793
        %v796 = vlaneseq
        %v797 = vshrl.u32 %v796, 7
        %v798 = vsub.s32 0, %v797
        %v799 = vrot.slane %v778, %v798
        %v801 = vmul.f32 %v794, %v799
        %v803 = vlaneseq
        %v804 = vshrl.u32 %v803, 7
        %v805 = vsub.s32 0, %v804
        %v806 = vrot.slane %v779, %v805
        %v808 = vadd.f32 %v801, %v806
        %v809 = vpack.c.bf16 %v808, %v808
        %v810 = vld [vmem:[#allocation8] sm:$0xf]
        %v811 = vld [vmem:[#allocation8 + $0x4] sm:$0xf]
        %v812 = vld [vmem:[#allocation8 + $0x8] sm:$0xf]
        %v813 = vld [vmem:[#allocation8 + $0xc] sm:$0xf]
        %v814 = vld [vmem:[#allocation10] sm:$0x1]
        %v816 = vlaneseq
        %v817 = vshrl.u32 %v816, 7
        %v818 = vsub.s32 0, %v817
        %v819 = vrot.slane %v814, %v818
        %v825 = vunpack.c.l.b16 %v810
        %v826 = vunpack.c.l.b16 %v811
        %v827 = vunpack.c.l.b16 %v812
        %v828 = vunpack.c.l.b16 %v813
        %v829 = vpack.c.b16 %v826, %v825
        %v830 = vpack.c.b16 %v828, %v827
        %v834 = vsel %vm780, %v809, 0
        %836 = vmatprep.subr.bf16.mxu0 0
        %837 = vmatpush1.bf16.msra.mxu0 %v829
        %838 = vmatprep.subr.bf16.mxu0 0
        %839 = vmatpush1.bf16.msra.mxu0 %v830
        %840 = vmatprep.subr.bf16.mxu0 0
        %841 = vmatpush1.bf16.msra.mxu0 0
        %842 = vmatprep.subr.bf16.mxu0 0
        %843 = vmatpush1.bf16.msra.mxu0 0
        %844 = vmatprep.subr.bf16.mxu0 0
        %845 = vmatpush1.bf16.msra.mxu0 0
        %846 = vmatprep.subr.bf16.mxu0 0
        %847 = vmatpush1.bf16.msra.mxu0 0
        %848 = vmatprep.subr.bf16.mxu0 0
        %849 = vmatpush1.bf16.msra.mxu0 0
        %850 = vmatprep.subr.bf16.mxu0 0
        %851 = vmatpush1.bf16.msra.mxu0 0
        %852 = vmatprep.subr.bf16.mxu0 0
        %853 = vmatpush1.bf16.msra.mxu0 0
        %854 = vmatprep.subr.bf16.mxu0 0
        %855 = vmatpush1.bf16.msra.mxu0 0
        %856 = vmatprep.subr.bf16.mxu0 0
        %857 = vmatpush1.bf16.msra.mxu0 0
        %858 = vmatprep.subr.bf16.mxu0 0
        %859 = vmatpush1.bf16.msra.mxu0 0
        %860 = vmatprep.subr.bf16.mxu0 0
        %861 = vmatpush1.bf16.msra.mxu0 0
        %862 = vmatprep.subr.bf16.mxu0 0
        %863 = vmatpush1.bf16.msra.mxu0 0
        %864 = vmatprep.subr.bf16.mxu0 0
        %865 = vmatpush1.bf16.msra.mxu0 0
        %866 = vmatprep.subr.bf16.mxu0 0
        %867 = vmatpush1.bf16.msra.mxu0 0
        %868 = vmatprep.mubr.bf16.mxu0 0
        %869 = vmatmul.mubr.bf16.gmra.mrb[0].mxu0 %v834
        %v870 = vpop.f32.mrb[0].mxu0
        %v871 = vadd.f32 %v819, %v870
        %v872 = vpop.f32.mrb[0].mxu0
        %v873 = vpop.f32.mrb[0].mxu0
        %v874 = vpop.f32.mrb[0].mxu0
        %875 = vdwg.mxu0
        %v876 = vld [vmem:[#allocation11] sm:$0xf]
        %v877 = vld [vmem:[#allocation11 + $0x4] sm:$0xf]
        %v878 = vld [vmem:[#allocation11 + $0x8] sm:$0xf]
        %v879 = vld [vmem:[#allocation11 + $0xc] sm:$0xf]
        %v880 = vld [vmem:[#allocation13] sm:$0x1]
        %v882 = vlaneseq
        %v883 = vshrl.u32 %v882, 7
        %v884 = vsub.s32 0, %v883
        %v885 = vrot.slane %v880, %v884
        %v891 = vunpack.c.l.b16 %v876
        %v892 = vunpack.c.l.b16 %v877
        %v893 = vunpack.c.l.b16 %v878
        %v894 = vunpack.c.l.b16 %v879
        %v895 = vpack.c.b16 %v892, %v891
        %v896 = vpack.c.b16 %v894, %v893
        %899 = vmatprep.subr.bf16.mxu0 0
        %900 = vmatpush1.bf16.msra.mxu0 %v895
        %901 = vmatprep.subr.bf16.mxu0 0
        %902 = vmatpush1.bf16.msra.mxu0 %v896
        %903 = vmatprep.subr.bf16.mxu0 0
        %904 = vmatpush1.bf16.msra.mxu0 0
        %905 = vmatprep.subr.bf16.mxu0 0
        %906 = vmatpush1.bf16.msra.mxu0 0
        %907 = vmatprep.subr.bf16.mxu0 0
        %908 = vmatpush1.bf16.msra.mxu0 0
        %909 = vmatprep.subr.bf16.mxu0 0
        %910 = vmatpush1.bf16.msra.mxu0 0
        %911 = vmatprep.subr.bf16.mxu0 0
        %912 = vmatpush1.bf16.msra.mxu0 0
        %913 = vmatprep.subr.bf16.mxu0 0
        %914 = vmatpush1.bf16.msra.mxu0 0
        %915 = vmatprep.subr.bf16.mxu0 0
        %916 = vmatpush1.bf16.msra.mxu0 0
        %917 = vmatprep.subr.bf16.mxu0 0
        %918 = vmatpush1.bf16.msra.mxu0 0
        %919 = vmatprep.subr.bf16.mxu0 0
        %920 = vmatpush1.bf16.msra.mxu0 0
        %921 = vmatprep.subr.bf16.mxu0 0
        %922 = vmatpush1.bf16.msra.mxu0 0
        %923 = vmatprep.subr.bf16.mxu0 0
        %924 = vmatpush1.bf16.msra.mxu0 0
        %925 = vmatprep.subr.bf16.mxu0 0
        %926 = vmatpush1.bf16.msra.mxu0 0
        %927 = vmatprep.subr.bf16.mxu0 0
        %928 = vmatpush1.bf16.msra.mxu0 0
        %929 = vmatprep.subr.bf16.mxu0 0
        %930 = vmatpush1.bf16.msra.mxu0 0
        %931 = vmatprep.mubr.bf16.mxu0 0
        %932 = vmatmul.mubr.bf16.gmra.mrb[0].mxu0 %v834
        %v933 = vpop.f32.mrb[0].mxu0
        %v934 = vadd.f32 %v885, %v933
        %v935 = vpop.f32.mrb[0].mxu0
        %v936 = vpop.f32.mrb[0].mxu0
        %v937 = vpop.f32.mrb[0].mxu0
        %938 = vdwg.mxu0
        %v939 = vld [vmem:[#allocation14] sm:$0xf]
        %v940 = vld [vmem:[#allocation14 + $0x4] sm:$0xf]
        %v941 = vld [vmem:[#allocation14 + $0x8] sm:$0xf]
        %v942 = vld [vmem:[#allocation14 + $0xc] sm:$0xf]
        %v943 = vld [vmem:[#allocation16] sm:$0x1]
        %v945 = vlaneseq
        %v946 = vshrl.u32 %v945, 7
        %v947 = vsub.s32 0, %v946
        %v948 = vrot.slane %v943, %v947
        %v954 = vunpack.c.l.b16 %v939
        %v955 = vunpack.c.l.b16 %v940
        %v956 = vunpack.c.l.b16 %v941
        %v957 = vunpack.c.l.b16 %v942
        %v958 = vpack.c.b16 %v955, %v954
        %v959 = vpack.c.b16 %v957, %v956
        %962 = vmatprep.subr.bf16.mxu0 0
        %963 = vmatpush1.bf16.msra.mxu0 %v958
        %964 = vmatprep.subr.bf16.mxu0 0
        %965 = vmatpush1.bf16.msra.mxu0 %v959
        %966 = vmatprep.subr.bf16.mxu0 0
        %967 = vmatpush1.bf16.msra.mxu0 0
        %968 = vmatprep.subr.bf16.mxu0 0
        %969 = vmatpush1.bf16.msra.mxu0 0
        %970 = vmatprep.subr.bf16.mxu0 0
        %971 = vmatpush1.bf16.msra.mxu0 0
        %972 = vmatprep.subr.bf16.mxu0 0
        %973 = vmatpush1.bf16.msra.mxu0 0
        %974 = vmatprep.subr.bf16.mxu0 0
        %975 = vmatpush1.bf16.msra.mxu0 0
        %976 = vmatprep.subr.bf16.mxu0 0
        %977 = vmatpush1.bf16.msra.mxu0 0
        %978 = vmatprep.subr.bf16.mxu0 0
        %979 = vmatpush1.bf16.msra.mxu0 0
        %980 = vmatprep.subr.bf16.mxu0 0
        %981 = vmatpush1.bf16.msra.mxu0 0
        %982 = vmatprep.subr.bf16.mxu0 0
        %983 = vmatpush1.bf16.msra.mxu0 0
        %984 = vmatprep.subr.bf16.mxu0 0
        %985 = vmatpush1.bf16.msra.mxu0 0
        %986 = vmatprep.subr.bf16.mxu0 0
        %987 = vmatpush1.bf16.msra.mxu0 0
        %988 = vmatprep.subr.bf16.mxu0 0
        %989 = vmatpush1.bf16.msra.mxu0 0
        %990 = vmatprep.subr.bf16.mxu0 0
        %991 = vmatpush1.bf16.msra.mxu0 0
        %992 = vmatprep.subr.bf16.mxu0 0
        %993 = vmatpush1.bf16.msra.mxu0 0
        %994 = vmatprep.mubr.bf16.mxu0 0
        %995 = vmatmul.mubr.bf16.gmra.mrb[0].mxu0 %v834
        %v996 = vpop.f32.mrb[0].mxu0
        %v997 = vadd.f32 %v948, %v996
        %v998 = vpop.f32.mrb[0].mxu0
        %v999 = vpop.f32.mrb[0].mxu0
        %v1000 = vpop.f32.mrb[0].mxu0
        %1001 = vdwg.mxu0
        %v1002 = vpack.c.bf16 %v871, %v871
        %1004 = vrot.lane.b32.xlu0 %v1002, 120
        %v1005 = vpop.permute.xlu0 %1004
        %1006 = vrot.lane.b32.xlu0 %v1002, 112
        %v1007 = vpop.permute.xlu0 %1006
        %1008 = vrot.lane.b32.xlu0 %v1002, 104
        %v1009 = vpop.permute.xlu0 %1008
        %v1011 = vunpack.c.l.s4 1983009808
        %v1012 = vunpack.c.0.s8 %v1011
        %v1013 = vlaneseq
        %v1014 = vshrl.u32 %v1013, 7
        %v1015 = vsub.s32 %v1012, %v1014
        %v1016 = vrot.slane %v1002, %v1015
        %v1019 = vunpack.c.l.s4 1983009808
        %v1020 = vunpack.c.0.s8 %v1019
        %v1021 = vlaneseq
        %v1022 = vshrl.u32 %v1021, 7
        %v1023 = vsub.s32 %v1020, %v1022
        %v1024 = vrot.slane %v1007, %v1023
        %v1025 = vcombine.low %v1016, %v1024
        %v1026 = vcombine.high %v1016, %v1024
        %v1028 = vunpack.c.l.s4 1934713408
        %v1029 = vunpack.c.0.s8 %v1028
        %v1030 = vlaneseq
        %v1031 = vshrl.u32 %v1030, 7
        %v1032 = vsub.s32 %v1029, %v1031
        %v1033 = vrot.slane %v1025, %v1032
        %v1035 = vunpack.c.l.s4 1934713408
        %v1036 = vunpack.c.0.s8 %v1035
        %v1037 = vlaneseq
        %v1038 = vshrl.u32 %v1037, 7
        %v1039 = vsub.s32 %v1036, %v1038
        %v1040 = vrot.slane %v1026, %v1039
        %v1041 = vcombine.high %v1033, 0
        %v1042 = vcombine.high %v1040, 0
        %v1045 = vunpack.c.l.s4 1983009808
        %v1046 = vunpack.c.0.s8 %v1045
        %v1047 = vlaneseq
        %v1048 = vshrl.u32 %v1047, 7
        %v1049 = vsub.s32 %v1046, %v1048
        %v1050 = vrot.slane %v1005, %v1049
        %v1053 = vunpack.c.l.s4 1983009808
        %v1054 = vunpack.c.0.s8 %v1053
        %v1055 = vlaneseq
        %v1056 = vshrl.u32 %v1055, 7
        %v1057 = vsub.s32 %v1054, %v1056
        %v1058 = vrot.slane %v1009, %v1057
        %v1059 = vcombine.low %v1050, %v1058
        %v1060 = vcombine.high %v1050, %v1058
        %v1062 = vunpack.c.l.s4 1934713408
        %v1063 = vunpack.c.0.s8 %v1062
        %v1064 = vlaneseq
        %v1065 = vshrl.u32 %v1064, 7
        %v1066 = vsub.s32 %v1063, %v1065
        %v1067 = vrot.slane %v1059, %v1066
        %v1069 = vunpack.c.l.s4 1934713408
        %v1070 = vunpack.c.0.s8 %v1069
        %v1071 = vlaneseq
        %v1072 = vshrl.u32 %v1071, 7
        %v1073 = vsub.s32 %v1070, %v1072
        %v1074 = vrot.slane %v1060, %v1073
        %v1075 = vcombine.high %v1067, 0
        %v1076 = vcombine.high %v1074, 0
        %v1079 = vpack.i.b16 %v1067, %v1033
        %v1081 = vshrl.u32 %v1033, 16
        %v1082 = vshrl.u32 %v1067, 16
        %v1083 = vpack.i.b16 %v1082, %v1081
        %v1087 = vpack.i.b16 %v1075, %v1041
        %v1089 = vshrl.u32 %v1041, 16
        %v1090 = vshrl.u32 %v1075, 16
        %v1091 = vpack.i.b16 %v1090, %v1089
        %v1095 = vpack.i.b16 %v1074, %v1040
        %v1097 = vshrl.u32 %v1040, 16
        %v1098 = vshrl.u32 %v1074, 16
        %v1099 = vpack.i.b16 %v1098, %v1097
        %v1103 = vpack.i.b16 %v1076, %v1042
        %v1105 = vshrl.u32 %v1042, 16
        %v1106 = vshrl.u32 %v1076, 16
        %v1107 = vpack.i.b16 %v1106, %v1105
        %v1109 = vcombine.low %v1079, %v1095
        %v1111 = vunpack.c.l.s4 1983009808
        %v1112 = vunpack.c.0.s8 %v1111
        %v1113 = vlaneseq
        %v1114 = vshrl.u32 %v1113, 7
        %v1115 = vsub.s32 %v1112, %v1114
        %v1116 = vrot.slane %v1109, %v1115
        %v1117 = vcombine.low %v1087, %v1103
        %v1119 = vunpack.c.l.s4 1983009808
        %v1120 = vunpack.c.0.s8 %v1119
        %v1121 = vlaneseq
        %v1122 = vshrl.u32 %v1121, 7
        %v1123 = vsub.s32 %v1120, %v1122
        %v1124 = vrot.slane %v1117, %v1123
        %v1125 = vcombine.low %v1116, %v1124
        %v1127 = vunpack.c.l.s4 1934713408
        %v1128 = vunpack.c.0.s8 %v1127
        %v1129 = vlaneseq
        %v1130 = vshrl.u32 %v1129, 7
        %v1131 = vsub.s32 %v1128, %v1130
        %v1132 = vrot.slane %v1125, %v1131
        %v1133 = vcombine.high %v1132, 0
        %v1134 = vcombine.low %v1083, %v1099
        %v1136 = vunpack.c.l.s4 1983009808
        %v1137 = vunpack.c.0.s8 %v1136
        %v1138 = vlaneseq
        %v1139 = vshrl.u32 %v1138, 7
        %v1140 = vsub.s32 %v1137, %v1139
        %v1141 = vrot.slane %v1134, %v1140
        %v1142 = vcombine.low %v1091, %v1107
        %v1144 = vunpack.c.l.s4 1983009808
        %v1145 = vunpack.c.0.s8 %v1144
        %v1146 = vlaneseq
        %v1147 = vshrl.u32 %v1146, 7
        %v1148 = vsub.s32 %v1145, %v1147
        %v1149 = vrot.slane %v1142, %v1148
        %v1150 = vcombine.low %v1141, %v1149
        %v1152 = vunpack.c.l.s4 1934713408
        %v1153 = vunpack.c.0.s8 %v1152
        %v1154 = vlaneseq
        %v1155 = vshrl.u32 %v1154, 7
        %v1156 = vsub.s32 %v1153, %v1155
        %v1157 = vrot.slane %v1150, %v1156
        %v1158 = vcombine.high %v1157, 0
        %v1161 = vpack.i.b16 %v1157, %v1132
        %v1162 = vshrl.u32 %v1132, 16
        %v1163 = vshrl.u32 %v1157, 16
        %v1164 = vpack.i.b16 %v1163, %v1162
        %v1167 = vpack.i.b16 %v1158, %v1133
        %v1168 = vshrl.u32 %v1133, 16
        %v1169 = vshrl.u32 %v1158, 16
        %v1170 = vpack.i.b16 %v1169, %v1168
        %v1171 = vpack.c.bf16 %v934, %v934
        %1173 = vrot.lane.b32.xlu0 %v1171, 120
        %v1174 = vpop.permute.xlu0 %1173
        %1175 = vrot.lane.b32.xlu0 %v1171, 112
        %v1176 = vpop.permute.xlu0 %1175
        %1177 = vrot.lane.b32.xlu0 %v1171, 104
        %v1178 = vpop.permute.xlu0 %1177
        %v1180 = vunpack.c.l.s4 1983009808
        %v1181 = vunpack.c.0.s8 %v1180
        %v1182 = vlaneseq
        %v1183 = vshrl.u32 %v1182, 7
        %v1184 = vsub.s32 %v1181, %v1183
        %v1185 = vrot.slane %v1171, %v1184
        %v1188 = vunpack.c.l.s4 1983009808
        %v1189 = vunpack.c.0.s8 %v1188
        %v1190 = vlaneseq
        %v1191 = vshrl.u32 %v1190, 7
        %v1192 = vsub.s32 %v1189, %v1191
        %v1193 = vrot.slane %v1176, %v1192
        %v1194 = vcombine.low %v1185, %v1193
        %v1195 = vcombine.high %v1185, %v1193
        %v1197 = vunpack.c.l.s4 1934713408
        %v1198 = vunpack.c.0.s8 %v1197
        %v1199 = vlaneseq
        %v1200 = vshrl.u32 %v1199, 7
        %v1201 = vsub.s32 %v1198, %v1200
        %v1202 = vrot.slane %v1194, %v1201
        %v1204 = vunpack.c.l.s4 1934713408
        %v1205 = vunpack.c.0.s8 %v1204
        %v1206 = vlaneseq
        %v1207 = vshrl.u32 %v1206, 7
        %v1208 = vsub.s32 %v1205, %v1207
        %v1209 = vrot.slane %v1195, %v1208
        %v1210 = vcombine.high %v1202, 0
        %v1211 = vcombine.high %v1209, 0
        %v1214 = vunpack.c.l.s4 1983009808
        %v1215 = vunpack.c.0.s8 %v1214
        %v1216 = vlaneseq
        %v1217 = vshrl.u32 %v1216, 7
        %v1218 = vsub.s32 %v1215, %v1217
        %v1219 = vrot.slane %v1174, %v1218
        %v1222 = vunpack.c.l.s4 1983009808
        %v1223 = vunpack.c.0.s8 %v1222
        %v1224 = vlaneseq
        %v1225 = vshrl.u32 %v1224, 7
        %v1226 = vsub.s32 %v1223, %v1225
        %v1227 = vrot.slane %v1178, %v1226
        %v1228 = vcombine.low %v1219, %v1227
        %v1229 = vcombine.high %v1219, %v1227
        %v1231 = vunpack.c.l.s4 1934713408
        %v1232 = vunpack.c.0.s8 %v1231
        %v1233 = vlaneseq
        %v1234 = vshrl.u32 %v1233, 7
        %v1235 = vsub.s32 %v1232, %v1234
        %v1236 = vrot.slane %v1228, %v1235
        %v1238 = vunpack.c.l.s4 1934713408
        %v1239 = vunpack.c.0.s8 %v1238
        %v1240 = vlaneseq
        %v1241 = vshrl.u32 %v1240, 7
        %v1242 = vsub.s32 %v1239, %v1241
        %v1243 = vrot.slane %v1229, %v1242
        %v1244 = vcombine.high %v1236, 0
        %v1245 = vcombine.high %v1243, 0
        %v1248 = vpack.i.b16 %v1236, %v1202
        %v1250 = vshrl.u32 %v1202, 16
        %v1251 = vshrl.u32 %v1236, 16
        %v1252 = vpack.i.b16 %v1251, %v1250
        %v1256 = vpack.i.b16 %v1244, %v1210
        %v1258 = vshrl.u32 %v1210, 16
        %v1259 = vshrl.u32 %v1244, 16
        %v1260 = vpack.i.b16 %v1259, %v1258
        %v1264 = vpack.i.b16 %v1243, %v1209
        %v1266 = vshrl.u32 %v1209, 16
        %v1267 = vshrl.u32 %v1243, 16
        %v1268 = vpack.i.b16 %v1267, %v1266
        %v1272 = vpack.i.b16 %v1245, %v1211
        %v1274 = vshrl.u32 %v1211, 16
        %v1275 = vshrl.u32 %v1245, 16
        %v1276 = vpack.i.b16 %v1275, %v1274
        %v1278 = vcombine.low %v1248, %v1264
        %v1280 = vunpack.c.l.s4 1983009808
        %v1281 = vunpack.c.0.s8 %v1280
        %v1282 = vlaneseq
        %v1283 = vshrl.u32 %v1282, 7
        %v1284 = vsub.s32 %v1281, %v1283
        %v1285 = vrot.slane %v1278, %v1284
        %v1286 = vcombine.low %v1256, %v1272
        %v1288 = vunpack.c.l.s4 1983009808
        %v1289 = vunpack.c.0.s8 %v1288
        %v1290 = vlaneseq
        %v1291 = vshrl.u32 %v1290, 7
        %v1292 = vsub.s32 %v1289, %v1291
        %v1293 = vrot.slane %v1286, %v1292
        %v1294 = vcombine.low %v1285, %v1293
        %v1296 = vunpack.c.l.s4 1934713408
        %v1297 = vunpack.c.0.s8 %v1296
        %v1298 = vlaneseq
        %v1299 = vshrl.u32 %v1298, 7
        %v1300 = vsub.s32 %v1297, %v1299
        %v1301 = vrot.slane %v1294, %v1300
        %v1302 = vcombine.high %v1301, 0
        %v1303 = vcombine.low %v1252, %v1268
        %v1305 = vunpack.c.l.s4 1983009808
        %v1306 = vunpack.c.0.s8 %v1305
        %v1307 = vlaneseq
        %v1308 = vshrl.u32 %v1307, 7
        %v1309 = vsub.s32 %v1306, %v1308
        %v1310 = vrot.slane %v1303, %v1309
        %v1311 = vcombine.low %v1260, %v1276
        %v1313 = vunpack.c.l.s4 1983009808
        %v1314 = vunpack.c.0.s8 %v1313
        %v1315 = vlaneseq
        %v1316 = vshrl.u32 %v1315, 7
        %v1317 = vsub.s32 %v1314, %v1316
        %v1318 = vrot.slane %v1311, %v1317
        %v1319 = vcombine.low %v1310, %v1318
        %v1321 = vunpack.c.l.s4 1934713408
        %v1322 = vunpack.c.0.s8 %v1321
        %v1323 = vlaneseq
        %v1324 = vshrl.u32 %v1323, 7
        %v1325 = vsub.s32 %v1322, %v1324
        %v1326 = vrot.slane %v1319, %v1325
        %v1327 = vcombine.high %v1326, 0
        %v1330 = vpack.i.b16 %v1326, %v1301
        %v1331 = vshrl.u32 %v1301, 16
        %v1332 = vshrl.u32 %v1326, 16
        %v1333 = vpack.i.b16 %v1332, %v1331
        %v1336 = vpack.i.b16 %v1327, %v1302
        %v1337 = vshrl.u32 %v1302, 16
        %v1338 = vshrl.u32 %v1327, 16
        %v1339 = vpack.i.b16 %v1338, %v1337
        %v1340 = vpack.c.bf16 %v997, %v997
        %1342 = vrot.lane.b32.xlu0 %v1340, 120
        %v1343 = vpop.permute.xlu0 %1342
        %1344 = vrot.lane.b32.xlu0 %v1340, 112
        %v1345 = vpop.permute.xlu0 %1344
        %1346 = vrot.lane.b32.xlu0 %v1340, 104
        %v1347 = vpop.permute.xlu0 %1346
        %v1349 = vunpack.c.l.s4 1983009808
        %v1350 = vunpack.c.0.s8 %v1349
        %v1351 = vlaneseq
        %v1352 = vshrl.u32 %v1351, 7
        %v1353 = vsub.s32 %v1350, %v1352
        %v1354 = vrot.slane %v1340, %v1353
        %v1357 = vunpack.c.l.s4 1983009808
        %v1358 = vunpack.c.0.s8 %v1357
        %v1359 = vlaneseq
        %v1360 = vshrl.u32 %v1359, 7
        %v1361 = vsub.s32 %v1358, %v1360
        %v1362 = vrot.slane %v1345, %v1361
        %v1363 = vcombine.low %v1354, %v1362
        %v1364 = vcombine.high %v1354, %v1362
        %v1366 = vunpack.c.l.s4 1934713408
        %v1367 = vunpack.c.0.s8 %v1366
        %v1368 = vlaneseq
        %v1369 = vshrl.u32 %v1368, 7
        %v1370 = vsub.s32 %v1367, %v1369
        %v1371 = vrot.slane %v1363, %v1370
        %v1373 = vunpack.c.l.s4 1934713408
        %v1374 = vunpack.c.0.s8 %v1373
        %v1375 = vlaneseq
        %v1376 = vshrl.u32 %v1375, 7
        %v1377 = vsub.s32 %v1374, %v1376
        %v1378 = vrot.slane %v1364, %v1377
        %v1379 = vcombine.high %v1371, 0
        %v1380 = vcombine.high %v1378, 0
        %v1383 = vunpack.c.l.s4 1983009808
        %v1384 = vunpack.c.0.s8 %v1383
        %v1385 = vlaneseq
        %v1386 = vshrl.u32 %v1385, 7
        %v1387 = vsub.s32 %v1384, %v1386
        %v1388 = vrot.slane %v1343, %v1387
        %v1391 = vunpack.c.l.s4 1983009808
        %v1392 = vunpack.c.0.s8 %v1391
        %v1393 = vlaneseq
        %v1394 = vshrl.u32 %v1393, 7
        %v1395 = vsub.s32 %v1392, %v1394
        %v1396 = vrot.slane %v1347, %v1395
        %v1397 = vcombine.low %v1388, %v1396
        %v1398 = vcombine.high %v1388, %v1396
        %v1400 = vunpack.c.l.s4 1934713408
        %v1401 = vunpack.c.0.s8 %v1400
        %v1402 = vlaneseq
        %v1403 = vshrl.u32 %v1402, 7
        %v1404 = vsub.s32 %v1401, %v1403
        %v1405 = vrot.slane %v1397, %v1404
        %v1407 = vunpack.c.l.s4 1934713408
        %v1408 = vunpack.c.0.s8 %v1407
        %v1409 = vlaneseq
        %v1410 = vshrl.u32 %v1409, 7
        %v1411 = vsub.s32 %v1408, %v1410
        %v1412 = vrot.slane %v1398, %v1411
        %v1413 = vcombine.high %v1405, 0
        %v1414 = vcombine.high %v1412, 0
        %v1417 = vpack.i.b16 %v1405, %v1371
        %v1419 = vshrl.u32 %v1371, 16
        %v1420 = vshrl.u32 %v1405, 16
        %v1421 = vpack.i.b16 %v1420, %v1419
        %v1425 = vpack.i.b16 %v1413, %v1379
        %v1427 = vshrl.u32 %v1379, 16
        %v1428 = vshrl.u32 %v1413, 16
        %v1429 = vpack.i.b16 %v1428, %v1427
        %v1433 = vpack.i.b16 %v1412, %v1378
        %v1435 = vshrl.u32 %v1378, 16
        %v1436 = vshrl.u32 %v1412, 16
        %v1437 = vpack.i.b16 %v1436, %v1435
        %v1441 = vpack.i.b16 %v1414, %v1380
        %v1443 = vshrl.u32 %v1380, 16
        %v1444 = vshrl.u32 %v1414, 16
        %v1445 = vpack.i.b16 %v1444, %v1443
        %v1447 = vcombine.low %v1417, %v1433
        %v1449 = vunpack.c.l.s4 1983009808
        %v1450 = vunpack.c.0.s8 %v1449
        %v1451 = vlaneseq
        %v1452 = vshrl.u32 %v1451, 7
        %v1453 = vsub.s32 %v1450, %v1452
        %v1454 = vrot.slane %v1447, %v1453
        %v1455 = vcombine.low %v1425, %v1441
        %v1457 = vunpack.c.l.s4 1983009808
        %v1458 = vunpack.c.0.s8 %v1457
        %v1459 = vlaneseq
        %v1460 = vshrl.u32 %v1459, 7
        %v1461 = vsub.s32 %v1458, %v1460
        %v1462 = vrot.slane %v1455, %v1461
        %v1463 = vcombine.low %v1454, %v1462
        %v1465 = vunpack.c.l.s4 1934713408
        %v1466 = vunpack.c.0.s8 %v1465
        %v1467 = vlaneseq
        %v1468 = vshrl.u32 %v1467, 7
        %v1469 = vsub.s32 %v1466, %v1468
        %v1470 = vrot.slane %v1463, %v1469
        %v1471 = vcombine.high %v1470, 0
        %v1472 = vcombine.low %v1421, %v1437
        %v1474 = vunpack.c.l.s4 1983009808
        %v1475 = vunpack.c.0.s8 %v1474
        %v1476 = vlaneseq
        %v1477 = vshrl.u32 %v1476, 7
        %v1478 = vsub.s32 %v1475, %v1477
        %v1479 = vrot.slane %v1472, %v1478
        %v1480 = vcombine.low %v1429, %v1445
        %v1482 = vunpack.c.l.s4 1983009808
        %v1483 = vunpack.c.0.s8 %v1482
        %v1484 = vlaneseq
        %v1485 = vshrl.u32 %v1484, 7
        %v1486 = vsub.s32 %v1483, %v1485
        %v1487 = vrot.slane %v1480, %v1486
        %v1488 = vcombine.low %v1479, %v1487
        %v1490 = vunpack.c.l.s4 1934713408
        %v1491 = vunpack.c.0.s8 %v1490
        %v1492 = vlaneseq
        %v1493 = vshrl.u32 %v1492, 7
        %v1494 = vsub.s32 %v1491, %v1493
        %v1495 = vrot.slane %v1488, %v1494
        %v1496 = vcombine.high %v1495, 0
        %v1499 = vpack.i.b16 %v1495, %v1470
        %v1500 = vshrl.u32 %v1470, 16
        %v1501 = vshrl.u32 %v1495, 16
        %v1502 = vpack.i.b16 %v1501, %v1500
        %v1505 = vpack.i.b16 %v1496, %v1471
        %v1506 = vshrl.u32 %v1471, 16
        %v1507 = vshrl.u32 %v1496, 16
        %v1508 = vpack.i.b16 %v1507, %v1506
        %v1509 = vlaneseq
        %v1510 = vshrl.u32 %v1509, 7
        %v1511 = vlaneseq
        %v1512 = vand.u32 %v1511, 127
        %vm1513 = vcmask 64512
        %v1515 = vsel %vm1513, %v1161, 0
        %v1518 = vsel %vm1513, %v1330, 0
        %1520 = vmatprep.subr.bf16.mxu0 0
        %1521 = vmatpush1.bf16.xpose.msra.mxu0 %v1518
        %1522 = vmatprep.subr.bf16.mxu0 0
        %1523 = vmatpush1.bf16.xpose.msra.mxu0 0
        %1524 = vmatprep.subr.bf16.mxu0 0
        %1525 = vmatpush1.bf16.xpose.msra.mxu0 0
        %1526 = vmatprep.subr.bf16.mxu0 0
        %1527 = vmatpush1.bf16.xpose.msra.mxu0 0
        %1528 = vmatprep.subr.bf16.mxu0 0
        %1529 = vmatpush1.bf16.xpose.msra.mxu0 0
        %1530 = vmatprep.subr.bf16.mxu0 0
        %1531 = vmatpush1.bf16.xpose.msra.mxu0 0
        %1532 = vmatprep.subr.bf16.mxu0 0
        %1533 = vmatpush1.bf16.xpose.msra.mxu0 0
        %1534 = vmatprep.subr.bf16.mxu0 0
        %1535 = vmatpush1.bf16.xpose.msra.mxu0 0
        %1536 = vmatprep.subr.bf16.mxu0 0
        %1537 = vmatpush1.bf16.xpose.msra.mxu0 0
        %1538 = vmatprep.subr.bf16.mxu0 0
        %1539 = vmatpush1.bf16.xpose.msra.mxu0 0
        %1540 = vmatprep.subr.bf16.mxu0 0
        %1541 = vmatpush1.bf16.xpose.msra.mxu0 0
        %1542 = vmatprep.subr.bf16.mxu0 0
        %1543 = vmatpush1.bf16.xpose.msra.mxu0 0
        %1544 = vmatprep.subr.bf16.mxu0 0
        %1545 = vmatpush1.bf16.xpose.msra.mxu0 0
        %1546 = vmatprep.subr.bf16.mxu0 0
        %1547 = vmatpush1.bf16.xpose.msra.mxu0 0
        %1548 = vmatprep.subr.bf16.mxu0 0
        %1549 = vmatpush1.bf16.xpose.msra.mxu0 0
        %1550 = vmatprep.subr.bf16.mxu0 0
        %1551 = vmatpush1.bf16.xpose.msra.mxu0 0
        %1552 = vmatprep.mubr.bf16.mxu0 0
        %1553 = vmatmul.mubr.bf16.gmra.mrb[0].mxu0 %v1515
        %v1554 = vpop.f32.mrb[0].mxu0
        %v1555 = vadd.f32 0.0, %v1554
        %v1556 = vpop.f32.mrb[0].mxu0
        %v1557 = vpop.f32.mrb[0].mxu0
        %v1558 = vpop.f32.mrb[0].mxu0
        %1559 = vdwg.mxu0
        %v1561 = vsel %vm1513, %v1164, 0
        %v1564 = vsel %vm1513, %v1333, 0
        %1566 = vmatprep.subr.bf16.mxu0 0
        %1567 = vmatpush1.bf16.xpose.msra.mxu0 %v1564
        %1568 = vmatprep.subr.bf16.mxu0 0
        %1569 = vmatpush1.bf16.xpose.msra.mxu0 0
        %1570 = vmatprep.subr.bf16.mxu0 0
        %1571 = vmatpush1.bf16.xpose.msra.mxu0 0
        %1572 = vmatprep.subr.bf16.mxu0 0
        %1573 = vmatpush1.bf16.xpose.msra.mxu0 0
        %1574 = vmatprep.subr.bf16.mxu0 0
        %1575 = vmatpush1.bf16.xpose.msra.mxu0 0
        %1576 = vmatprep.subr.bf16.mxu0 0
        %1577 = vmatpush1.bf16.xpose.msra.mxu0 0
        %1578 = vmatprep.subr.bf16.mxu0 0
        %1579 = vmatpush1.bf16.xpose.msra.mxu0 0
        %1580 = vmatprep.subr.bf16.mxu0 0
        %1581 = vmatpush1.bf16.xpose.msra.mxu0 0
        %1582 = vmatprep.subr.bf16.mxu0 0
        %1583 = vmatpush1.bf16.xpose.msra.mxu0 0
        %1584 = vmatprep.subr.bf16.mxu0 0
        %1585 = vmatpush1.bf16.xpose.msra.mxu0 0
        %1586 = vmatprep.subr.bf16.mxu0 0
        %1587 = vmatpush1.bf16.xpose.msra.mxu0 0
        %1588 = vmatprep.subr.bf16.mxu0 0
        %1589 = vmatpush1.bf16.xpose.msra.mxu0 0
        %1590 = vmatprep.subr.bf16.mxu0 0
        %1591 = vmatpush1.bf16.xpose.msra.mxu0 0
        %1592 = vmatprep.subr.bf16.mxu0 0
        %1593 = vmatpush1.bf16.xpose.msra.mxu0 0
        %1594 = vmatprep.subr.bf16.mxu0 0
        %1595 = vmatpush1.bf16.xpose.msra.mxu0 0
        %1596 = vmatprep.subr.bf16.mxu0 0
        %1597 = vmatpush1.bf16.xpose.msra.mxu0 0
        %1598 = vmatprep.mubr.bf16.mxu0 0
        %1599 = vmatmul.mubr.bf16.gmra.mrb[0].mxu0 %v1561
        %v1600 = vpop.f32.mrb[0].mxu0
        %v1601 = vadd.f32 0.0, %v1600
        %v1602 = vpop.f32.mrb[0].mxu0
        %v1603 = vpop.f32.mrb[0].mxu0
        %v1604 = vpop.f32.mrb[0].mxu0
        %1605 = vdwg.mxu0
        %v1607 = vsel %vm1513, %v1167, 0
        %v1610 = vsel %vm1513, %v1336, 0
        %1612 = vmatprep.subr.bf16.mxu0 0
        %1613 = vmatpush1.bf16.xpose.msra.mxu0 %v1610
        %1614 = vmatprep.subr.bf16.mxu0 0
        %1615 = vmatpush1.bf16.xpose.msra.mxu0 0
        %1616 = vmatprep.subr.bf16.mxu0 0
        %1617 = vmatpush1.bf16.xpose.msra.mxu0 0
        %1618 = vmatprep.subr.bf16.mxu0 0
        %1619 = vmatpush1.bf16.xpose.msra.mxu0 0
        %1620 = vmatprep.subr.bf16.mxu0 0
        %1621 = vmatpush1.bf16.xpose.msra.mxu0 0
        %1622 = vmatprep.subr.bf16.mxu0 0
        %1623 = vmatpush1.bf16.xpose.msra.mxu0 0
        %1624 = vmatprep.subr.bf16.mxu0 0
        %1625 = vmatpush1.bf16.xpose.msra.mxu0 0
        %1626 = vmatprep.subr.bf16.mxu0 0
        %1627 = vmatpush1.bf16.xpose.msra.mxu0 0
        %1628 = vmatprep.subr.bf16.mxu0 0
        %1629 = vmatpush1.bf16.xpose.msra.mxu0 0
        %1630 = vmatprep.subr.bf16.mxu0 0
        %1631 = vmatpush1.bf16.xpose.msra.mxu0 0
        %1632 = vmatprep.subr.bf16.mxu0 0
        %1633 = vmatpush1.bf16.xpose.msra.mxu0 0
        %1634 = vmatprep.subr.bf16.mxu0 0
        %1635 = vmatpush1.bf16.xpose.msra.mxu0 0
        %1636 = vmatprep.subr.bf16.mxu0 0
        %1637 = vmatpush1.bf16.xpose.msra.mxu0 0
        %1638 = vmatprep.subr.bf16.mxu0 0
        %1639 = vmatpush1.bf16.xpose.msra.mxu0 0
        %1640 = vmatprep.subr.bf16.mxu0 0
        %1641 = vmatpush1.bf16.xpose.msra.mxu0 0
        %1642 = vmatprep.subr.bf16.mxu0 0
        %1643 = vmatpush1.bf16.xpose.msra.mxu0 0
        %1644 = vmatprep.mubr.bf16.mxu0 0
        %1645 = vmatmul.mubr.bf16.gmra.mrb[0].mxu0 %v1607
        %v1646 = vpop.f32.mrb[0].mxu0
        %v1647 = vadd.f32 0.0, %v1646
        %v1648 = vpop.f32.mrb[0].mxu0
        %v1649 = vpop.f32.mrb[0].mxu0
        %v1650 = vpop.f32.mrb[0].mxu0
        %1651 = vdwg.mxu0
        %v1653 = vsel %vm1513, %v1170, 0
        %v1656 = vsel %vm1513, %v1339, 0
        %1658 = vmatprep.subr.bf16.mxu0 0
        %1659 = vmatpush1.bf16.xpose.msra.mxu0 %v1656
        %1660 = vmatprep.subr.bf16.mxu0 0
        %1661 = vmatpush1.bf16.xpose.msra.mxu0 0
        %1662 = vmatprep.subr.bf16.mxu0 0
        %1663 = vmatpush1.bf16.xpose.msra.mxu0 0
        %1664 = vmatprep.subr.bf16.mxu0 0
        %1665 = vmatpush1.bf16.xpose.msra.mxu0 0
        %1666 = vmatprep.subr.bf16.mxu0 0
        %1667 = vmatpush1.bf16.xpose.msra.mxu0 0
        %1668 = vmatprep.subr.bf16.mxu0 0
        %1669 = vmatpush1.bf16.xpose.msra.mxu0 0
        %1670 = vmatprep.subr.bf16.mxu0 0
        %1671 = vmatpush1.bf16.xpose.msra.mxu0 0
        %1672 = vmatprep.subr.bf16.mxu0 0
        %1673 = vmatpush1.bf16.xpose.msra.mxu0 0
        %1674 = vmatprep.subr.bf16.mxu0 0
        %1675 = vmatpush1.bf16.xpose.msra.mxu0 0
        %1676 = vmatprep.subr.bf16.mxu0 0
        %1677 = vmatpush1.bf16.xpose.msra.mxu0 0
        %1678 = vmatprep.subr.bf16.mxu0 0
        %1679 = vmatpush1.bf16.xpose.msra.mxu0 0
        %1680 = vmatprep.subr.bf16.mxu0 0
        %1681 = vmatpush1.bf16.xpose.msra.mxu0 0
        %1682 = vmatprep.subr.bf16.mxu0 0
        %1683 = vmatpush1.bf16.xpose.msra.mxu0 0
        %1684 = vmatprep.subr.bf16.mxu0 0
        %1685 = vmatpush1.bf16.xpose.msra.mxu0 0
        %1686 = vmatprep.subr.bf16.mxu0 0
        %1687 = vmatpush1.bf16.xpose.msra.mxu0 0
        %1688 = vmatprep.subr.bf16.mxu0 0
        %1689 = vmatpush1.bf16.xpose.msra.mxu0 0
        %1690 = vmatprep.mubr.bf16.mxu0 0
        %1691 = vmatmul.mubr.bf16.gmra.mrb[0].mxu0 %v1653
        %v1692 = vpop.f32.mrb[0].mxu0
        %v1693 = vadd.f32 0.0, %v1692
        %v1694 = vpop.f32.mrb[0].mxu0
        %v1695 = vpop.f32.mrb[0].mxu0
        %v1696 = vpop.f32.mrb[0].mxu0
        %1697 = vdwg.mxu0
        %v1698 = vmul.f32 %v1555, 0.35355338
        %v1699 = vmul.f32 %v1601, 0.35355338
        %v1700 = vmul.f32 %v1647, 0.35355338
        %v1701 = vmul.f32 %v1693, 0.35355338
        %vm1702 = vcmp.ge.s32.totalorder %v1510, %v1512
        %v1703 = vsel %vm1702, 1, 0
        %vm1704 = vcmp.eq.s32.totalorder %v1703, 1
        %v1705 = vsel %vm1704, %v1698, -1e+30
        %v1706 = vsel %vm1704, %v1699, -1e+30
        %v1707 = vsel %vm1704, %v1700, -1e+30
        %v1708 = vsel %vm1704, %v1701, -1e+30
        %v1709 = vsel %vm1513, %v1705, -inf
        %1710 = vmax.xlane.f32.xlu0 %v1709
        %v1711 = vpop.xlane.xlu0 %1710
        %v1712 = vsel %vm1513, %v1706, -inf
        %1713 = vmax.xlane.f32.xlu0 %v1712
        %v1714 = vpop.xlane.xlu0 %1713
        %v1715 = vsel %vm1513, %v1707, -inf
        %1716 = vmax.xlane.f32.xlu0 %v1715
        %v1717 = vpop.xlane.xlu0 %1716
        %v1718 = vsel %vm1513, %v1708, -inf
        %1719 = vmax.xlane.f32.xlu0 %v1718
        %v1720 = vpop.xlane.xlu0 %1719
        %v1721 = vmax.f32 %v1711, -1e+30
        %v1722 = vmax.f32 %v1714, -1e+30
        %v1723 = vmax.f32 %v1717, -1e+30
        %v1724 = vmax.f32 %v1720, -1e+30
        %v1725 = vsub.f32 -1e+30, %v1721
        %v1726 = vsub.f32 -1e+30, %v1722
        %v1727 = vsub.f32 -1e+30, %v1723
        %v1728 = vsub.f32 -1e+30, %v1724
        %v1729 = vmul.f32 %v1725, 1.442695
        %v1730 = vpow.pop %v1729
        %v1731 = vmul.f32 %v1726, 1.442695
        %v1732 = vpow.pop %v1731
        %v1733 = vmul.f32 %v1727, 1.442695
        %v1734 = vpow.pop %v1733
        %v1735 = vmul.f32 %v1728, 1.442695
        %v1736 = vpow.pop %v1735
        %v1737 = vsub.f32 %v1705, %v1721
        %v1738 = vsub.f32 %v1706, %v1722
        %v1739 = vsub.f32 %v1707, %v1723
        %v1740 = vsub.f32 %v1708, %v1724
        %v1741 = vmul.f32 %v1737, 1.442695
        %v1742 = vpow.pop %v1741
        %v1743 = vmul.f32 %v1738, 1.442695
        %v1744 = vpow.pop %v1743
        %v1745 = vmul.f32 %v1739, 1.442695
        %v1746 = vpow.pop %v1745
        %v1747 = vmul.f32 %v1740, 1.442695
        %v1748 = vpow.pop %v1747
        %v1749 = vmul.f32 %v1730, 0.0
        %v1750 = vmul.f32 %v1732, 0.0
        %v1751 = vmul.f32 %v1734, 0.0
        %v1752 = vmul.f32 %v1736, 0.0
        %v1753 = vsel %vm1513, %v1742, 0.0
        %1754 = vadd.xlane.f32.xlu0 %v1753
        %v1755 = vpop.xlane.xlu0 %1754
        %v1756 = vsel %vm1513, %v1744, 0.0
        %1757 = vadd.xlane.f32.xlu0 %v1756
        %v1758 = vpop.xlane.xlu0 %1757
        %v1759 = vsel %vm1513, %v1746, 0.0
        %1760 = vadd.xlane.f32.xlu0 %v1759
        %v1761 = vpop.xlane.xlu0 %1760
        %v1762 = vsel %vm1513, %v1748, 0.0
        %1763 = vadd.xlane.f32.xlu0 %v1762
        %v1764 = vpop.xlane.xlu0 %1763
        %v1765 = vadd.f32 %v1749, %v1755
        %v1766 = vadd.f32 %v1750, %v1758
        %v1767 = vadd.f32 %v1751, %v1761
        %v1768 = vadd.f32 %v1752, %v1764
        %v1769 = vpack.c.bf16 %v1742, %v1742
        %v1770 = vpack.c.bf16 %v1744, %v1744
        %v1771 = vpack.c.bf16 %v1746, %v1746
        %v1772 = vpack.c.bf16 %v1748, %v1748
        %v1774 = vsel %vm1513, %v1769, 0
        %vm1776 = vcmask 1043456
        %v1778 = vsel %vm1776, %v1499, 0
        %1780 = vmatprep.subr.bf16.mxu0 0
        %1781 = vmatpush1.bf16.msra.mxu0 %v1778
        %1782 = vmatprep.subr.bf16.mxu0 0
        %1783 = vmatpush1.bf16.msra.mxu0 0
        %1784 = vmatprep.subr.bf16.mxu0 0
        %1785 = vmatpush1.bf16.msra.mxu0 0
        %1786 = vmatprep.subr.bf16.mxu0 0
        %1787 = vmatpush1.bf16.msra.mxu0 0
        %1788 = vmatprep.subr.bf16.mxu0 0
        %1789 = vmatpush1.bf16.msra.mxu0 0
        %1790 = vmatprep.subr.bf16.mxu0 0
        %1791 = vmatpush1.bf16.msra.mxu0 0
        %1792 = vmatprep.subr.bf16.mxu0 0
        %1793 = vmatpush1.bf16.msra.mxu0 0
        %1794 = vmatprep.subr.bf16.mxu0 0
        %1795 = vmatpush1.bf16.msra.mxu0 0
        %1796 = vmatprep.subr.bf16.mxu0 0
        %1797 = vmatpush1.bf16.msra.mxu0 0
        %1798 = vmatprep.subr.bf16.mxu0 0
        %1799 = vmatpush1.bf16.msra.mxu0 0
        %1800 = vmatprep.subr.bf16.mxu0 0
        %1801 = vmatpush1.bf16.msra.mxu0 0
        %1802 = vmatprep.subr.bf16.mxu0 0
        %1803 = vmatpush1.bf16.msra.mxu0 0
        %1804 = vmatprep.subr.bf16.mxu0 0
        %1805 = vmatpush1.bf16.msra.mxu0 0
        %1806 = vmatprep.subr.bf16.mxu0 0
        %1807 = vmatpush1.bf16.msra.mxu0 0
        %1808 = vmatprep.subr.bf16.mxu0 0
        %1809 = vmatpush1.bf16.msra.mxu0 0
        %1810 = vmatprep.subr.bf16.mxu0 0
        %1811 = vmatpush1.bf16.msra.mxu0 0
        %1812 = vmatprep.mubr.bf16.mxu0 0
        %1813 = vmatmul.mubr.bf16.gmra.mrb[0].mxu0 %v1774
        %v1814 = vpop.f32.mrb[0].mxu0
        %v1815 = vadd.f32 0.0, %v1814
        %v1816 = vpop.f32.mrb[0].mxu0
        %v1817 = vpop.f32.mrb[0].mxu0
        %v1818 = vpop.f32.mrb[0].mxu0
        %1819 = vdwg.mxu0
        %v1821 = vsel %vm1513, %v1770, 0
        %v1824 = vsel %vm1776, %v1502, 0
        %1826 = vmatprep.subr.bf16.mxu0 0
        %1827 = vmatpush1.bf16.msra.mxu0 %v1824
        %1828 = vmatprep.subr.bf16.mxu0 0
        %1829 = vmatpush1.bf16.msra.mxu0 0
        %1830 = vmatprep.subr.bf16.mxu0 0
        %1831 = vmatpush1.bf16.msra.mxu0 0
        %1832 = vmatprep.subr.bf16.mxu0 0
        %1833 = vmatpush1.bf16.msra.mxu0 0
        %1834 = vmatprep.subr.bf16.mxu0 0
        %1835 = vmatpush1.bf16.msra.mxu0 0
        %1836 = vmatprep.subr.bf16.mxu0 0
        %1837 = vmatpush1.bf16.msra.mxu0 0
        %1838 = vmatprep.subr.bf16.mxu0 0
        %1839 = vmatpush1.bf16.msra.mxu0 0
        %1840 = vmatprep.subr.bf16.mxu0 0
        %1841 = vmatpush1.bf16.msra.mxu0 0
        %1842 = vmatprep.subr.bf16.mxu0 0
        %1843 = vmatpush1.bf16.msra.mxu0 0
        %1844 = vmatprep.subr.bf16.mxu0 0
        %1845 = vmatpush1.bf16.msra.mxu0 0
        %1846 = vmatprep.subr.bf16.mxu0 0
        %1847 = vmatpush1.bf16.msra.mxu0 0
        %1848 = vmatprep.subr.bf16.mxu0 0
        %1849 = vmatpush1.bf16.msra.mxu0 0
        %1850 = vmatprep.subr.bf16.mxu0 0
        %1851 = vmatpush1.bf16.msra.mxu0 0
        %1852 = vmatprep.subr.bf16.mxu0 0
        %1853 = vmatpush1.bf16.msra.mxu0 0
        %1854 = vmatprep.subr.bf16.mxu0 0
        %1855 = vmatpush1.bf16.msra.mxu0 0
        %1856 = vmatprep.subr.bf16.mxu0 0
        %1857 = vmatpush1.bf16.msra.mxu0 0
        %1858 = vmatprep.mubr.bf16.mxu0 0
        %1859 = vmatmul.mubr.bf16.gmra.mrb[0].mxu0 %v1821
        %v1860 = vpop.f32.mrb[0].mxu0
        %v1861 = vadd.f32 0.0, %v1860
        %v1862 = vpop.f32.mrb[0].mxu0
        %v1863 = vpop.f32.mrb[0].mxu0
        %v1864 = vpop.f32.mrb[0].mxu0
        %1865 = vdwg.mxu0
        %v1867 = vsel %vm1513, %v1771, 0
        %v1870 = vsel %vm1776, %v1505, 0
        %1872 = vmatprep.subr.bf16.mxu0 0
        %1873 = vmatpush1.bf16.msra.mxu0 %v1870
        %1874 = vmatprep.subr.bf16.mxu0 0
        %1875 = vmatpush1.bf16.msra.mxu0 0
        %1876 = vmatprep.subr.bf16.mxu0 0
        %1877 = vmatpush1.bf16.msra.mxu0 0
        %1878 = vmatprep.subr.bf16.mxu0 0
        %1879 = vmatpush1.bf16.msra.mxu0 0
        %1880 = vmatprep.subr.bf16.mxu0 0
        %1881 = vmatpush1.bf16.msra.mxu0 0
        %1882 = vmatprep.subr.bf16.mxu0 0
        %1883 = vmatpush1.bf16.msra.mxu0 0
        %1884 = vmatprep.subr.bf16.mxu0 0
        %1885 = vmatpush1.bf16.msra.mxu0 0
        %1886 = vmatprep.subr.bf16.mxu0 0
        %1887 = vmatpush1.bf16.msra.mxu0 0
        %1888 = vmatprep.subr.bf16.mxu0 0
        %1889 = vmatpush1.bf16.msra.mxu0 0
        %1890 = vmatprep.subr.bf16.mxu0 0
        %1891 = vmatpush1.bf16.msra.mxu0 0
        %1892 = vmatprep.subr.bf16.mxu0 0
        %1893 = vmatpush1.bf16.msra.mxu0 0
        %1894 = vmatprep.subr.bf16.mxu0 0
        %1895 = vmatpush1.bf16.msra.mxu0 0
        %1896 = vmatprep.subr.bf16.mxu0 0
        %1897 = vmatpush1.bf16.msra.mxu0 0
        %1898 = vmatprep.subr.bf16.mxu0 0
        %1899 = vmatpush1.bf16.msra.mxu0 0
        %1900 = vmatprep.subr.bf16.mxu0 0
        %1901 = vmatpush1.bf16.msra.mxu0 0
        %1902 = vmatprep.subr.bf16.mxu0 0
        %1903 = vmatpush1.bf16.msra.mxu0 0
        %1904 = vmatprep.mubr.bf16.mxu0 0
        %1905 = vmatmul.mubr.bf16.gmra.mrb[0].mxu0 %v1867
        %v1906 = vpop.f32.mrb[0].mxu0
        %v1907 = vadd.f32 0.0, %v1906
        %v1908 = vpop.f32.mrb[0].mxu0
        %v1909 = vpop.f32.mrb[0].mxu0
        %v1910 = vpop.f32.mrb[0].mxu0
        %1911 = vdwg.mxu0
        %v1913 = vsel %vm1513, %v1772, 0
        %v1916 = vsel %vm1776, %v1508, 0
        %1918 = vmatprep.subr.bf16.mxu0 0
        %1919 = vmatpush1.bf16.msra.mxu0 %v1916
        %1920 = vmatprep.subr.bf16.mxu0 0
        %1921 = vmatpush1.bf16.msra.mxu0 0
        %1922 = vmatprep.subr.bf16.mxu0 0
        %1923 = vmatpush1.bf16.msra.mxu0 0
        %1924 = vmatprep.subr.bf16.mxu0 0
        %1925 = vmatpush1.bf16.msra.mxu0 0
        %1926 = vmatprep.subr.bf16.mxu0 0
        %1927 = vmatpush1.bf16.msra.mxu0 0
        %1928 = vmatprep.subr.bf16.mxu0 0
        %1929 = vmatpush1.bf16.msra.mxu0 0
        %1930 = vmatprep.subr.bf16.mxu0 0
        %1931 = vmatpush1.bf16.msra.mxu0 0
        %1932 = vmatprep.subr.bf16.mxu0 0
        %1933 = vmatpush1.bf16.msra.mxu0 0
        %1934 = vmatprep.subr.bf16.mxu0 0
        %1935 = vmatpush1.bf16.msra.mxu0 0
        %1936 = vmatprep.subr.bf16.mxu0 0
        %1937 = vmatpush1.bf16.msra.mxu0 0
        %1938 = vmatprep.subr.bf16.mxu0 0
        %1939 = vmatpush1.bf16.msra.mxu0 0
        %1940 = vmatprep.subr.bf16.mxu0 0
        %1941 = vmatpush1.bf16.msra.mxu0 0
        %1942 = vmatprep.subr.bf16.mxu0 0
        %1943 = vmatpush1.bf16.msra.mxu0 0
        %1944 = vmatprep.subr.bf16.mxu0 0
        %1945 = vmatpush1.bf16.msra.mxu0 0
        %1946 = vmatprep.subr.bf16.mxu0 0
        %1947 = vmatpush1.bf16.msra.mxu0 0
        %1948 = vmatprep.subr.bf16.mxu0 0
        %1949 = vmatpush1.bf16.msra.mxu0 0
        %1950 = vmatprep.mubr.bf16.mxu0 0
        %1951 = vmatmul.mubr.bf16.gmra.mrb[0].mxu0 %v1913
        %v1952 = vpop.f32.mrb[0].mxu0
        %v1953 = vadd.f32 0.0, %v1952
        %v1954 = vpop.f32.mrb[0].mxu0
        %v1955 = vpop.f32.mrb[0].mxu0
        %v1956 = vpop.f32.mrb[0].mxu0
        %1957 = vdwg.mxu0
        %v1958 = vadd.f32 %v1749, %v1815
        %v1959 = vadd.f32 %v1750, %v1861
        %v1960 = vadd.f32 %v1751, %v1907
        %v1961 = vadd.f32 %v1752, %v1953
        %v1962 = vrcp.pop %v1765
        %v1963 = vrcp.pop %v1766
        %v1964 = vrcp.pop %v1767
        %v1965 = vrcp.pop %v1768
        %v1966 = vmul.f32 %v1958, %v1962
        %v1967 = vmul.f32 %v1959, %v1963
        %v1968 = vmul.f32 %v1960, %v1964
        %v1969 = vmul.f32 %v1961, %v1965
        %v1970 = vpack.c.bf16 %v1966, %v1966
        %v1972 = vunpack.c.l.s4 1983009808
        %v1973 = vunpack.c.0.s8 %v1972
        %v1974 = vlaneseq
        %v1975 = vshrl.u32 %v1974, 7
        %v1976 = vsub.s32 %v1973, %v1975
        %v1977 = vrot.slane %v1970, %v1976
        %v1978 = vpack.c.bf16 %v1968, %v1968
        %v1980 = vunpack.c.l.s4 1983009808
        %v1981 = vunpack.c.0.s8 %v1980
        %v1982 = vlaneseq
        %v1983 = vshrl.u32 %v1982, 7
        %v1984 = vsub.s32 %v1981, %v1983
        %v1985 = vrot.slane %v1978, %v1984
        %v1986 = vcombine.low %v1977, %v1985
        %v1987 = vcombine.high %v1977, %v1985
        %v1989 = vunpack.c.l.s4 1934713408
        %v1990 = vunpack.c.0.s8 %v1989
        %v1991 = vlaneseq
        %v1992 = vshrl.u32 %v1991, 7
        %v1993 = vsub.s32 %v1990, %v1992
        %v1994 = vrot.slane %v1986, %v1993
        %v1996 = vunpack.c.l.s4 1934713408
        %v1997 = vunpack.c.0.s8 %v1996
        %v1998 = vlaneseq
        %v1999 = vshrl.u32 %v1998, 7
        %v2000 = vsub.s32 %v1997, %v1999
        %v2001 = vrot.slane %v1987, %v2000
        %v2002 = vcombine.high %v1994, 0
        %v2003 = vcombine.high %v2001, 0
        %v2004 = vpack.c.bf16 %v1967, %v1967
        %v2006 = vunpack.c.l.s4 1983009808
        %v2007 = vunpack.c.0.s8 %v2006
        %v2008 = vlaneseq
        %v2009 = vshrl.u32 %v2008, 7
        %v2010 = vsub.s32 %v2007, %v2009
        %v2011 = vrot.slane %v2004, %v2010
        %v2012 = vpack.c.bf16 %v1969, %v1969
        %v2014 = vunpack.c.l.s4 1983009808
        %v2015 = vunpack.c.0.s8 %v2014
        %v2016 = vlaneseq
        %v2017 = vshrl.u32 %v2016, 7
        %v2018 = vsub.s32 %v2015, %v2017
        %v2019 = vrot.slane %v2012, %v2018
        %v2020 = vcombine.low %v2011, %v2019
        %v2021 = vcombine.high %v2011, %v2019
        %v2023 = vunpack.c.l.s4 1934713408
        %v2024 = vunpack.c.0.s8 %v2023
        %v2025 = vlaneseq
        %v2026 = vshrl.u32 %v2025, 7
        %v2027 = vsub.s32 %v2024, %v2026
        %v2028 = vrot.slane %v2020, %v2027
        %v2030 = vunpack.c.l.s4 1934713408
        %v2031 = vunpack.c.0.s8 %v2030
        %v2032 = vlaneseq
        %v2033 = vshrl.u32 %v2032, 7
        %v2034 = vsub.s32 %v2031, %v2033
        %v2035 = vrot.slane %v2021, %v2034
        %v2036 = vcombine.high %v2028, 0
        %v2037 = vcombine.high %v2035, 0
        %v2040 = vpack.i.b16 %v2028, %v1994
        %v2042 = vshrl.u32 %v1994, 16
        %v2043 = vshrl.u32 %v2028, 16
        %v2044 = vpack.i.b16 %v2043, %v2042
        %v2048 = vpack.i.b16 %v2036, %v2002
        %v2050 = vshrl.u32 %v2002, 16
        %v2051 = vshrl.u32 %v2036, 16
        %v2052 = vpack.i.b16 %v2051, %v2050
        %v2056 = vpack.i.b16 %v2035, %v2001
        %v2058 = vshrl.u32 %v2001, 16
        %v2059 = vshrl.u32 %v2035, 16
        %v2060 = vpack.i.b16 %v2059, %v2058
        %v2064 = vpack.i.b16 %v2037, %v2003
        %v2066 = vshrl.u32 %v2003, 16
        %v2067 = vshrl.u32 %v2037, 16
        %v2068 = vpack.i.b16 %v2067, %v2066
        %v2070 = vcombine.low %v2040, %v2056
        %v2072 = vunpack.c.l.s4 1983009808
        %v2073 = vunpack.c.0.s8 %v2072
        %v2074 = vlaneseq
        %v2075 = vshrl.u32 %v2074, 7
        %v2076 = vsub.s32 %v2073, %v2075
        %v2077 = vrot.slane %v2070, %v2076
        %v2078 = vcombine.low %v2048, %v2064
        %v2080 = vunpack.c.l.s4 1983009808
        %v2081 = vunpack.c.0.s8 %v2080
        %v2082 = vlaneseq
        %v2083 = vshrl.u32 %v2082, 7
        %v2084 = vsub.s32 %v2081, %v2083
        %v2085 = vrot.slane %v2078, %v2084
        %v2086 = vcombine.low %v2077, %v2085
        %v2088 = vunpack.c.l.s4 1934713408
        %v2089 = vunpack.c.0.s8 %v2088
        %v2090 = vlaneseq
        %v2091 = vshrl.u32 %v2090, 7
        %v2092 = vsub.s32 %v2089, %v2091
        %v2093 = vrot.slane %v2086, %v2092
        %v2094 = vcombine.high %v2093, 0
        %v2095 = vcombine.low %v2044, %v2060
        %v2097 = vunpack.c.l.s4 1983009808
        %v2098 = vunpack.c.0.s8 %v2097
        %v2099 = vlaneseq
        %v2100 = vshrl.u32 %v2099, 7
        %v2101 = vsub.s32 %v2098, %v2100
        %v2102 = vrot.slane %v2095, %v2101
        %v2103 = vcombine.low %v2052, %v2068
        %v2105 = vunpack.c.l.s4 1983009808
        %v2106 = vunpack.c.0.s8 %v2105
        %v2107 = vlaneseq
        %v2108 = vshrl.u32 %v2107, 7
        %v2109 = vsub.s32 %v2106, %v2108
        %v2110 = vrot.slane %v2103, %v2109
        %v2111 = vcombine.low %v2102, %v2110
        %v2113 = vunpack.c.l.s4 1934713408
        %v2114 = vunpack.c.0.s8 %v2113
        %v2115 = vlaneseq
        %v2116 = vshrl.u32 %v2115, 7
        %v2117 = vsub.s32 %v2114, %v2116
        %v2118 = vrot.slane %v2111, %v2117
        %v2119 = vcombine.high %v2118, 0
        %v2122 = vpack.i.b16 %v2118, %v2093
        %v2123 = vshrl.u32 %v2093, 16
        %v2124 = vshrl.u32 %v2118, 16
        %v2125 = vpack.i.b16 %v2124, %v2123
        %v2128 = vpack.i.b16 %v2119, %v2094
        %v2129 = vshrl.u32 %v2094, 16
        %v2130 = vshrl.u32 %v2119, 16
        %v2131 = vpack.i.b16 %v2130, %v2129
        %2132 = vrot.lane.b32.xlu0 %v2125, 8
        %v2133 = vpop.permute.xlu0 %2132
        %2134 = vrot.lane.b32.xlu0 %v2128, 16
        %v2135 = vpop.permute.xlu0 %2134
        %2136 = vrot.lane.b32.xlu0 %v2131, 24
        %v2137 = vpop.permute.xlu0 %2136
        %v2140 = vsel %vm1513, %v2122, %v2133
        %vm2141 = vcmask 130048
        %v2143 = vsel %vm2141, %v2140, %v2135
        %vm2144 = vcmask 195584
        %v2146 = vsel %vm2144, %v2143, %v2137
        %v2147 = vld [vmem:[#allocation17] sm:$0xf]
        %v2148 = vld [vmem:[#allocation17 + $0x4] sm:$0xf]
        %v2149 = vld [vmem:[#allocation17 + $0x8] sm:$0xf]
        %v2150 = vld [vmem:[#allocation17 + $0xc] sm:$0xf]
        %v2151 = vld [vmem:[#allocation19] sm:$0x1]
        %v2153 = vlaneseq
        %v2154 = vshrl.u32 %v2153, 7
        %v2155 = vsub.s32 0, %v2154
        %v2156 = vrot.slane %v2151, %v2155
        %v2162 = vunpack.c.l.b16 %v2147
        %v2163 = vunpack.c.l.b16 %v2148
        %v2164 = vunpack.c.l.b16 %v2149
        %v2165 = vunpack.c.l.b16 %v2150
        %v2166 = vpack.c.b16 %v2163, %v2162
        %v2167 = vpack.c.b16 %v2165, %v2164
        %v2170 = vsel %vm780, %v2146, 0
        %2172 = vmatprep.subr.bf16.mxu0 0
        %2173 = vmatpush1.bf16.msra.mxu0 %v2166
        %2174 = vmatprep.subr.bf16.mxu0 0
        %2175 = vmatpush1.bf16.msra.mxu0 %v2167
        %2176 = vmatprep.subr.bf16.mxu0 0
        %2177 = vmatpush1.bf16.msra.mxu0 0
        %2178 = vmatprep.subr.bf16.mxu0 0
        %2179 = vmatpush1.bf16.msra.mxu0 0
        %2180 = vmatprep.subr.bf16.mxu0 0
        %2181 = vmatpush1.bf16.msra.mxu0 0
        %2182 = vmatprep.subr.bf16.mxu0 0
        %2183 = vmatpush1.bf16.msra.mxu0 0
        %2184 = vmatprep.subr.bf16.mxu0 0
        %2185 = vmatpush1.bf16.msra.mxu0 0
        %2186 = vmatprep.subr.bf16.mxu0 0
        %2187 = vmatpush1.bf16.msra.mxu0 0
        %2188 = vmatprep.subr.bf16.mxu0 0
        %2189 = vmatpush1.bf16.msra.mxu0 0
        %2190 = vmatprep.subr.bf16.mxu0 0
        %2191 = vmatpush1.bf16.msra.mxu0 0
        %2192 = vmatprep.subr.bf16.mxu0 0
        %2193 = vmatpush1.bf16.msra.mxu0 0
        %2194 = vmatprep.subr.bf16.mxu0 0
        %2195 = vmatpush1.bf16.msra.mxu0 0
        %2196 = vmatprep.subr.bf16.mxu0 0
        %2197 = vmatpush1.bf16.msra.mxu0 0
        %2198 = vmatprep.subr.bf16.mxu0 0
        %2199 = vmatpush1.bf16.msra.mxu0 0
        %2200 = vmatprep.subr.bf16.mxu0 0
        %2201 = vmatpush1.bf16.msra.mxu0 0
        %2202 = vmatprep.subr.bf16.mxu0 0
        %2203 = vmatpush1.bf16.msra.mxu0 0
        %2204 = vmatprep.mubr.bf16.mxu0 0
        %2205 = vmatmul.mubr.bf16.gmra.mrb[0].mxu0 %v2170
        %v2206 = vpop.f32.mrb[0].mxu0
        %v2207 = vadd.f32 %v2156, %v2206
        %v2208 = vpop.f32.mrb[0].mxu0
        %v2209 = vpop.f32.mrb[0].mxu0
        %v2210 = vpop.f32.mrb[0].mxu0
        %2211 = vdwg.mxu0
        %v2212 = vadd.f32 %v777, %v2207
        %v2213 = vld [vmem:[#allocation20] sm:$0x1]
        %v2214 = vld [vmem:[#allocation22] sm:$0x1]
        %v2215 = vsel %vm780, %v2212, 0.0
        %2216 = vadd.xlane.f32.xlu0 %v2215
        %v2217 = vpop.xlane.xlu0 %2216
        %v2218 = vmul.f32 %v2217, %v784
        %v2219 = vsub.f32 %v2212, %v2218
        %v2220 = vmul.f32 %v2219, %v2219
        %v2221 = vsel %vm780, %v2220, 0.0
        %2222 = vadd.xlane.f32.xlu0 %v2221
        %v2223 = vpop.xlane.xlu0 %2222
        %v2224 = vmul.f32 %v2223, %v784
        %v2225 = vadd.f32 %v2224, 1e-05
        %v2226 = vrsqrt.pop %v2225
        %v2227 = vmul.f32 %v2219, %v2226
        %v2229 = vlaneseq
        %v2230 = vshrl.u32 %v2229, 7
        %v2231 = vsub.s32 0, %v2230
        %v2232 = vrot.slane %v2213, %v2231
        %v2234 = vmul.f32 %v2227, %v2232
        %v2236 = vlaneseq
        %v2237 = vshrl.u32 %v2236, 7
        %v2238 = vsub.s32 0, %v2237
        %v2239 = vrot.slane %v2214, %v2238
        %v2241 = vadd.f32 %v2234, %v2239
        %v2242 = vpack.c.bf16 %v2241, %v2241
        %v2243 = vld [vmem:[#allocation23] sm:$0xf]
        %v2244 = vld [vmem:[#allocation23 + $0x4] sm:$0xf]
        %v2245 = vld [vmem:[#allocation23 + $0x8] sm:$0xf]
        %v2246 = vld [vmem:[#allocation23 + $0xc] sm:$0xf]
        %v2247 = vld [vmem:[#allocation25] sm:$0x1]
        %v2248 = vld [vmem:[#allocation26] sm:$0xf]
        %v2249 = vld [vmem:[#allocation26 + $0x4] sm:$0xf]
        %v2250 = vld [vmem:[#allocation26 + $0x8] sm:$0xf]
        %v2251 = vld [vmem:[#allocation26 + $0xc] sm:$0xf]
        %v2252 = vld [vmem:[#allocation26 + $0x10] sm:$0xf]
        %v2253 = vld [vmem:[#allocation26 + $0x14] sm:$0xf]
        %v2254 = vld [vmem:[#allocation26 + $0x18] sm:$0xf]
        %v2255 = vld [vmem:[#allocation26 + $0x1c] sm:$0xf]
        %v2256 = vld [vmem:[#allocation26 + $0x20] sm:$0xf]
        %v2257 = vld [vmem:[#allocation26 + $0x24] sm:$0xf]
        %v2258 = vld [vmem:[#allocation26 + $0x28] sm:$0xf]
        %v2259 = vld [vmem:[#allocation26 + $0x2c] sm:$0xf]
        %v2260 = vld [vmem:[#allocation26 + $0x30] sm:$0xf]
        %v2261 = vld [vmem:[#allocation26 + $0x34] sm:$0xf]
        %v2262 = vld [vmem:[#allocation26 + $0x38] sm:$0xf]
        %v2263 = vld [vmem:[#allocation26 + $0x3c] sm:$0xf]
        %v2265 = vlaneseq
        %v2266 = vshrl.u32 %v2265, 7
        %v2267 = vsub.s32 0, %v2266
        %v2268 = vrot.slane %v2247, %v2267
        %v2274 = vunpack.c.l.b16 %v2243
        %v2275 = vunpack.c.l.b16 %v2244
        %v2276 = vunpack.c.l.b16 %v2245
        %v2277 = vunpack.c.l.b16 %v2246
        %v2278 = vpack.c.b16 %v2275, %v2274
        %v2279 = vpack.c.b16 %v2277, %v2276
        %v2283 = vsel %vm780, %v2242, 0
        %2285 = vmatprep.subr.bf16.mxu0 0
        %2286 = vmatpush1.bf16.msra.mxu0 %v2278
        %2287 = vmatprep.subr.bf16.mxu0 0
        %2288 = vmatpush1.bf16.msra.mxu0 %v2279
        %2289 = vmatprep.subr.bf16.mxu0 0
        %2290 = vmatpush1.bf16.msra.mxu0 0
        %2291 = vmatprep.subr.bf16.mxu0 0
        %2292 = vmatpush1.bf16.msra.mxu0 0
        %2293 = vmatprep.subr.bf16.mxu0 0
        %2294 = vmatpush1.bf16.msra.mxu0 0
        %2295 = vmatprep.subr.bf16.mxu0 0
        %2296 = vmatpush1.bf16.msra.mxu0 0
        %2297 = vmatprep.subr.bf16.mxu0 0
        %2298 = vmatpush1.bf16.msra.mxu0 0
        %2299 = vmatprep.subr.bf16.mxu0 0
        %2300 = vmatpush1.bf16.msra.mxu0 0
        %2301 = vmatprep.subr.bf16.mxu0 0
        %2302 = vmatpush1.bf16.msra.mxu0 0
        %2303 = vmatprep.subr.bf16.mxu0 0
        %2304 = vmatpush1.bf16.msra.mxu0 0
        %2305 = vmatprep.subr.bf16.mxu0 0
        %2306 = vmatpush1.bf16.msra.mxu0 0
        %2307 = vmatprep.subr.bf16.mxu0 0
        %2308 = vmatpush1.bf16.msra.mxu0 0
        %2309 = vmatprep.subr.bf16.mxu0 0
        %2310 = vmatpush1.bf16.msra.mxu0 0
        %2311 = vmatprep.subr.bf16.mxu0 0
        %2312 = vmatpush1.bf16.msra.mxu0 0
        %2313 = vmatprep.subr.bf16.mxu0 0
        %2314 = vmatpush1.bf16.msra.mxu0 0
        %2315 = vmatprep.subr.bf16.mxu0 0
        %2316 = vmatpush1.bf16.msra.mxu0 0
        %2317 = vmatprep.mubr.bf16.mxu0 0
        %2318 = vmatmul.mubr.bf16.gmra.mrb[0].mxu0 %v2283
        %v2319 = vpop.f32.mrb[0].mxu0
        %v2320 = vadd.f32 %v2268, %v2319
        %v2321 = vpop.f32.mrb[0].mxu0
        %v2322 = vpop.f32.mrb[0].mxu0
        %v2323 = vpop.f32.mrb[0].mxu0
        %2324 = vdwg.mxu0
        %v2325 = vmul.f32 %v2320, 0.5
        %v2326 = vmul.f32 %v2320, 0.044715
        %v2327 = vmul.f32 %v2326, %v2320
        %v2328 = vmul.f32 %v2327, %v2320
        %v2329 = vadd.f32 %v2320, %v2328
        %v2330 = vmul.f32 %v2329, 0.7978846
        %v2331 = vtanh.pop %v2330
        %v2332 = vadd.f32 %v2331, 1.0
        %v2333 = vmul.f32 %v2325, %v2332
        %v2334 = vpack.c.bf16 %v2333, %v2333
        %v2335 = vld [vmem:[#allocation28] sm:$0x1]
        %v2337 = vlaneseq
        %v2338 = vshrl.u32 %v2337, 7
        %v2339 = vsub.s32 0, %v2338
        %v2340 = vrot.slane %v2335, %v2339
        %v2358 = vunpack.c.l.b16 %v2248
        %v2359 = vunpack.c.l.b16 %v2249
        %v2360 = vunpack.c.l.b16 %v2250
        %v2361 = vunpack.c.l.b16 %v2251
        %v2362 = vunpack.c.l.b16 %v2252
        %v2363 = vunpack.c.l.b16 %v2253
        %v2364 = vunpack.c.l.b16 %v2254
        %v2365 = vunpack.c.l.b16 %v2255
        %v2366 = vunpack.c.l.b16 %v2256
        %v2367 = vunpack.c.l.b16 %v2257
        %v2368 = vunpack.c.l.b16 %v2258
        %v2369 = vunpack.c.l.b16 %v2259
        %v2370 = vunpack.c.l.b16 %v2260
        %v2371 = vunpack.c.l.b16 %v2261
        %v2372 = vunpack.c.l.b16 %v2262
        %v2373 = vunpack.c.l.b16 %v2263
        %v2374 = vpack.c.b16 %v2359, %v2358
        %v2375 = vpack.c.b16 %v2361, %v2360
        %v2376 = vpack.c.b16 %v2363, %v2362
        %v2377 = vpack.c.b16 %v2365, %v2364
        %v2378 = vpack.c.b16 %v2367, %v2366
        %v2379 = vpack.c.b16 %v2369, %v2368
        %v2380 = vpack.c.b16 %v2371, %v2370
        %v2381 = vpack.c.b16 %v2373, %v2372
        %2390 = vmatprep.subr.bf16.mxu0 0
        %2391 = vmatpush1.bf16.msra.mxu0 %v2374
        %2392 = vmatprep.subr.bf16.mxu0 0
        %2393 = vmatpush1.bf16.msra.mxu0 %v2375
        %2394 = vmatprep.subr.bf16.mxu0 0
        %2395 = vmatpush1.bf16.msra.mxu0 %v2376
        %2396 = vmatprep.subr.bf16.mxu0 0
        %2397 = vmatpush1.bf16.msra.mxu0 %v2377
        %2398 = vmatprep.subr.bf16.mxu0 0
        %2399 = vmatpush1.bf16.msra.mxu0 %v2378
        %2400 = vmatprep.subr.bf16.mxu0 0
        %2401 = vmatpush1.bf16.msra.mxu0 %v2379
        %2402 = vmatprep.subr.bf16.mxu0 0
        %2403 = vmatpush1.bf16.msra.mxu0 %v2380
        %2404 = vmatprep.subr.bf16.mxu0 0
        %2405 = vmatpush1.bf16.msra.mxu0 %v2381
        %2406 = vmatprep.subr.bf16.mxu0 0
        %2407 = vmatpush1.bf16.msra.mxu0 0
        %2408 = vmatprep.subr.bf16.mxu0 0
        %2409 = vmatpush1.bf16.msra.mxu0 0
        %2410 = vmatprep.subr.bf16.mxu0 0
        %2411 = vmatpush1.bf16.msra.mxu0 0
        %2412 = vmatprep.subr.bf16.mxu0 0
        %2413 = vmatpush1.bf16.msra.mxu0 0
        %2414 = vmatprep.subr.bf16.mxu0 0
        %2415 = vmatpush1.bf16.msra.mxu0 0
        %2416 = vmatprep.subr.bf16.mxu0 0
        %2417 = vmatpush1.bf16.msra.mxu0 0
        %2418 = vmatprep.subr.bf16.mxu0 0
        %2419 = vmatpush1.bf16.msra.mxu0 0
        %2420 = vmatprep.subr.bf16.mxu0 0
        %2421 = vmatpush1.bf16.msra.mxu0 0
        %2422 = vmatprep.mubr.bf16.mxu0 0
        %2423 = vmatmul.mubr.bf16.gmra.mrb[0].mxu0 %v2334
        %v2424 = vpop.f32.mrb[0].mxu0
        %v2425 = vadd.f32 %v2340, %v2424
        %v2426 = vpop.f32.mrb[0].mxu0
        %v2427 = vpop.f32.mrb[0].mxu0
        %v2428 = vpop.f32.mrb[0].mxu0
        %2429 = vdwg.mxu0
        %v2430 = vadd.f32 %v2212, %v2425
        %2431 = vst.msk [vmem:[%s775] sm:$0xff] %vm780, %v2430
        %s2432 = sand.u32 %s412, 1
        %s2433 = scalar_lea.sflag [#allocation4], %s2432
        %s2434 = sand.u32 %s412, 1
        %s2435 = smul.addr %s2434, 8
        %s2436 = scalar_lea.vmem [#allocation29], %s2435
        // Predicated region
        $region157: #{tpu_custom_call.1} parent=87 // pred_check
          %p2437 = pneg %p422
        $region158: #{tpu_custom_call.1} parent=87 // pred_check_branch
          %2439 = sbr.rel (%p2437) target = $region160
        $region159: #{tpu_custom_call.1} parent=87 // pred_region
          %s2441 = ssub.s32 128, 128
          %2442 = vsyncadd %s2433, %s2441
          %s2443 = smul.addr %s42, 128
          %s2444 = scalar_lea.hbm %s17, %s2443
          %s2446 = sshll.u32 %s2436, 4
          %s2447 = int_to_ptr.vmem [resolvable:$true] %s2446
          %2449 = dma.vmem_to_hbm [thread:$0]  %s2447, 128, %s2444, %s2433
        $region160: #{tpu_custom_call.1} parent=87 // pred_fallthru
          _
      $region88: #{tpu_custom_call.1} parent=5 // pred_fallthru
        _
      %p2450 = scmp.le.s32.totalorder 2, %s37
      // Predicated region
      $region161: #{tpu_custom_call.1} parent=5 // pred_check
        %p2451 = pneg %p2450
      $region162: #{tpu_custom_call.1} parent=5 // pred_check_branch
        %2453 = sbr.rel (%p2451) target = $region164
      $region163: #{tpu_custom_call.1} parent=5 // pred_region
        %s2454 = ssub.s32 %s37, 2
        // Predicated region
        $region165: #{tpu_custom_call.1} parent=163 // pred_check
          %p2455 = pneg %p428
        $region166: #{tpu_custom_call.1} parent=163 // pred_check_branch
          %2457 = sbr.rel (%p2455) target = $region168
        $region167: #{tpu_custom_call.1} parent=163 // pred_region
          %s2458 = sand.u32 %s413, 1
          %s2459 = scalar_lea.sflag [#allocation4], %s2458
          %s2460 = sand.u32 %s413, 1
          %s2461 = smul.addr %s2460, 8
          %s2462 = scalar_lea.vmem [#allocation29], %s2461
          %2463 = dma.done %s2459, 128
        $region168: #{tpu_custom_call.1} parent=163 // pred_fallthru
          _
      $region164: #{tpu_custom_call.1} parent=5 // pred_fallthru
        _
    $region6: #{tpu_custom_call.1} parent=1 // loop_footer
      %s41 = sadd.s32 1, %s37
    $region7: #{tpu_custom_call.1} parent=1 // loop_footer_branch
      %36 = sbr.rel target = $region3
    $region8: #{tpu_custom_call.1} parent=1 // loop_exit
      _
    %2464 = vsyncpa [#allocation3], 1
    %s2465 = scalar_lea.sflag [#allocation3], 1
    %2466 = vsyncpa %s2465, 1
    %2467 = vsyncpa [#allocation6], 1
    %2468 = vsyncpa [#allocation9], 1
    %2469 = vsyncpa [#allocation12], 1
    %2470 = vsyncpa [#allocation15], 1
    %2471 = vsyncpa [#allocation18], 1
    %2472 = vsyncpa [#allocation21], 1
    %2473 = vsyncpa [#allocation24], 1
    %2474 = vsyncpa [#allocation27], 1
    %2475 = vsyncpa [#allocation4], 1
    %s2476 = scalar_lea.sflag [#allocation4], 1
    %2477 = vsyncpa %s2476, 1

</llo_original>
